<compile_context>
chip_gen: v7x
topology: tpu7x:2x2x1
jax: 0.10.0
libtpu: 0.0.40
codegen_flags: <defaults>
</compile_context>

<pallas_src>
import jax
import jax.numpy as jnp
from jax.experimental import pallas as pl
from jax.experimental.pallas import tpu as pltpu


def lstm_char_decoder_forward(embedding, init_hidden_states, params,
                              weights_dtype=jnp.float32):
    """embedding: (T, B, I) f32; init_hidden_states: (1, B, H) f32.

    Returns (logits (T, B, V) f32, (h_final (1, B, H), c_final (1, B, H))).
    """
    T, B, I = embedding.shape
    H = init_hidden_states.shape[-1]
    V = params["fc_w"].shape[0]
    wd = jnp.dtype(weights_dtype)

    # ---- wrapper-side layout plumbing (free): pre-transpose weights, fold biases.
    # Only the two big hoisted matmuls (x@Wih, hall@Wfc) take the optional
    # low-precision weight dtype; transform and the serial recurrence (Whh)
    # stay f32 so no pack/round lands on the per-step critical path and the
    # recurrent state keeps full precision.
    Wt = params["transform_w"].T.astype(jnp.float32)                       # (H, H)
    Wih = params["w_ih"].T.astype(wd)                                      # (I, 4H)
    Whh = params["w_hh"].T.astype(jnp.float32)                             # (H, 4H)
    Wfc = params["fc_w"].T.astype(wd)                                      # (H, V)
    bt = params["transform_b"].reshape(1, H).astype(jnp.float32)           # (1, H)
    bg = (params["b_ih"] + params["b_hh"]).reshape(1, 4 * H).astype(jnp.float32)  # (1, 4H)
    bfc = params["fc_b"].reshape(1, V).astype(jnp.float32)                 # (1, V)

    x2d = embedding.reshape(T * B, I)            # time-major rows, lane = feature
    h0 = init_hidden_states.reshape(B, H)

    def kernel(x_ref, h0_ref, Wt_ref, bt_ref, Wih_ref, Whh_ref, bg_ref,
               Wfc_ref, bfc_ref, logits_ref, hT_ref, cT_ref, hall_sc):
        mm_dtype = Wih_ref.dtype   # weights_dtype for the two hoisted matmuls

        # ---- init: h0 = transform(init_hidden_states), c0 = 0 (f32) ----------
        h = (jnp.dot(h0_ref[...], Wt_ref[...],
                     preferred_element_type=jnp.float32) + bt_ref[...])   # (B, H)
        c = jnp.zeros_like(h)

        # ---- hoisted input projection: one (T*B, I) x (I, 4H) matmul ---------
        xw = (jnp.dot(x_ref[...].astype(mm_dtype), Wih_ref[...],
                      preferred_element_type=jnp.float32) + bg_ref[...])  # (T*B, 4H)

        Whh_v = Whh_ref[...]       # f32, loaded into vregs once

        # ---- single-EUP gate nonlinearity masks (hoisted, constant) ----------
        #   i/f/o gates: sigmoid(x) = 0.5*tanh(0.5*x) + 0.5   (one EUP op)
        #   g gate     : tanh(x)
        col = jax.lax.broadcasted_iota(jnp.int32, (1, 4 * H), 1)
        is_g = jnp.logical_and(col >= 2 * H, col < 3 * H)
        pre_s = jnp.where(is_g, 1.0, 0.5).astype(jnp.float32)    # (1, 4H)
        post_s = pre_s
        post_b = jnp.where(is_g, 0.0, 0.5).astype(jnp.float32)   # (1, 4H)

        # ---- fully unrolled recurrence (T static; PyTorch gate order i,f,g,o) -
        for t in range(T):
            gates = xw[t * B:(t + 1) * B, :] + jnp.dot(
                h, Whh_v, preferred_element_type=jnp.float32)             # (B, 4H)
            act = jnp.tanh(gates * pre_s) * post_s + post_b   # all 4 gates, 1 EUP op
            i_g = act[:, 0 * H:1 * H]
            f_g = act[:, 1 * H:2 * H]
            g_g = act[:, 2 * H:3 * H]
            o_g = act[:, 3 * H:4 * H]
            c = f_g * c + i_g * g_g
            h = o_g * jnp.tanh(c)
            hall_sc[t * B:(t + 1) * B, :] = h

        # ---- hoisted fc projection: one matmul + one contiguous store --------
        logits_ref[...] = (jnp.dot(hall_sc[...].astype(mm_dtype), Wfc_ref[...],
                                   preferred_element_type=jnp.float32)
                           + bfc_ref[...]).astype(logits_ref.dtype)

        # ---- final states ----------------------------------------------------
        hT_ref[...] = h.astype(hT_ref.dtype)
        cT_ref[...] = c.astype(cT_ref.dtype)

    vmem_spec = lambda: pl.BlockSpec(memory_space=pltpu.MemorySpace.VMEM)

    logits2d, h_final, c_final = pl.pallas_call(
        kernel,
        out_shape=(
            jax.ShapeDtypeStruct((T * B, V), jnp.float32),
            jax.ShapeDtypeStruct((B, H), jnp.float32),
            jax.ShapeDtypeStruct((B, H), jnp.float32),
        ),
        in_specs=[vmem_spec() for _ in range(9)],
        out_specs=(vmem_spec(), vmem_spec(), vmem_spec()),
        scratch_shapes=[pltpu.VMEM((T * B, H), jnp.float32)],   # h_t accumulator
    )(x2d, h0, Wt, bt, Wih, Whh, bg, Wfc, bfc)

    logits = logits2d.reshape(T, B, V)
    return logits, (h_final[None], c_final[None])


def _reference_forward(embedding, init_hidden_states, params):
    """Pure-JAX reference mirroring PyTorch semantics (eval mode)."""
    H = init_hidden_states.shape[-1]
    h = init_hidden_states[0] @ params["transform_w"].T + params["transform_b"]
    c = jnp.zeros_like(h)

    def step(carry, x):
        h, c = carry
        gates = (x @ params["w_ih"].T + params["b_ih"]
                 + h @ params["w_hh"].T + params["b_hh"])
        i = jax.nn.sigmoid(gates[:, 0 * H:1 * H])
        f = jax.nn.sigmoid(gates[:, 1 * H:2 * H])
        g = jnp.tanh(gates[:, 2 * H:3 * H])
        o = jax.nn.sigmoid(gates[:, 3 * H:4 * H])
        c = f * c + i * g
        h = o * jnp.tanh(c)
        return (h, c), h

    (h, c), hs = jax.lax.scan(step, (h, c), embedding)
    logits = hs @ params["fc_w"].T + params["fc_b"]
    return logits, (h[None], c[None])


if __name__ == "__main__":
    # Shapes consistent with the module's forward:
    #   embedding: (seg_len + 1, num_segs, input_size), init_hidden: (1, num_segs, hidden)
    vocab_size, input_size, hidden_size = 32, 16, 32
    T, B = 9, 4  # seg_len + 1 = 9 time steps, 4 segments

    key = jax.random.PRNGKey(0)
    ks = jax.random.split(key, 10)
    s = 0.1
    params = {
        "transform_w": s * jax.random.normal(ks[0], (hidden_size, hidden_size), jnp.float32),
        "transform_b": s * jax.random.normal(ks[1], (hidden_size,), jnp.float32),
        "w_ih": s * jax.random.normal(ks[2], (4 * hidden_size, input_size), jnp.float32),
        "w_hh": s * jax.random.normal(ks[3], (4 * hidden_size, hidden_size), jnp.float32),
        "b_ih": s * jax.random.normal(ks[4], (4 * hidden_size,), jnp.float32),
        "b_hh": s * jax.random.normal(ks[5], (4 * hidden_size,), jnp.float32),
        "fc_w": s * jax.random.normal(ks[6], (vocab_size, hidden_size), jnp.float32),
        "fc_b": s * jax.random.normal(ks[7], (vocab_size,), jnp.float32),
    }

    embedding = jax.random.normal(ks[8], (T, B, input_size), jnp.float32)
    init_hidden = jax.random.normal(ks[9], (1, B, hidden_size), jnp.float32)

    # f32 weights path (v5e-friendly default) — tight tolerance.
    logits, (h_f, c_f) = lstm_char_decoder_forward(embedding, init_hidden, params)
    jax.block_until_ready((logits, h_f, c_f))

    ref_logits, (ref_h, ref_c) = _reference_forward(embedding, init_hidden, params)
    assert logits.shape == (T, B, vocab_size)
    assert h_f.shape == (1, B, hidden_size) and c_f.shape == (1, B, hidden_size)
    assert jnp.allclose(logits, ref_logits, atol=1e-4, rtol=1e-4)
    assert jnp.allclose(h_f, ref_h, atol=1e-4, rtol=1e-4)
    assert jnp.allclose(c_f, ref_c, atol=1e-4, rtol=1e-4)

    # bf16-weight path (v6e/v7x MXU optimization for the two hoisted matmuls;
    # the recurrence stays f32 so error does not compound over T).
    logits_bf, (h_bf, c_bf) = lstm_char_decoder_forward(
        embedding, init_hidden, params, weights_dtype=jnp.bfloat16)
    jax.block_until_ready((logits_bf, h_bf, c_bf))
    assert jnp.allclose(logits_bf, ref_logits, atol=5e-2, rtol=5e-2)
    assert jnp.allclose(h_bf, ref_h, atol=5e-2, rtol=5e-2)
    assert jnp.allclose(c_bf, ref_c, atol=5e-2, rtol=5e-2)

    print("KERNEL_OK")
</pallas_src>

<mosaic_0001>
module attributes {stable_mosaic.version = 11 : i64} {
  func.func @kernel(%arg0: memref<36x16xf32, #tpu.memory_space<vmem>>, %arg1: memref<4x32xf32, #tpu.memory_space<vmem>>, %arg2: memref<32x32xf32, #tpu.memory_space<vmem>>, %arg3: memref<1x32xf32, #tpu.memory_space<vmem>>, %arg4: memref<16x128xf32, #tpu.memory_space<vmem>>, %arg5: memref<32x128xf32, #tpu.memory_space<vmem>>, %arg6: memref<1x128xf32, #tpu.memory_space<vmem>>, %arg7: memref<32x32xf32, #tpu.memory_space<vmem>>, %arg8: memref<1x32xf32, #tpu.memory_space<vmem>>, %arg9: memref<36x32xf32, #tpu.memory_space<vmem>>, %arg10: memref<4x32xf32, #tpu.memory_space<vmem>>, %arg11: memref<4x32xf32, #tpu.memory_space<vmem>>, %arg12: memref<36x32xf32, #tpu.memory_space<vmem>>) attributes {dimension_semantics = [], scalar_prefetch = 0 : i64, scratch_operands = 1 : i64, tpu.core_type = #tpu.core_type<tc>} {
    %c0 = arith.constant 0 : index
    %c0_0 = arith.constant 0 : index
    %0 = vector.load %arg1[%c0, %c0_0] : memref<4x32xf32, #tpu.memory_space<vmem>>, vector<4x32xf32>
    %c0_1 = arith.constant 0 : index
    %c0_2 = arith.constant 0 : index
    %1 = vector.load %arg2[%c0_1, %c0_2] : memref<32x32xf32, #tpu.memory_space<vmem>>, vector<32x32xf32>
    %cst = arith.constant dense<0.000000e+00> : vector<4x32xf32>
    %2 = tpu.matmul %0, %1, %cst {dimension_numbers = #tpu.dot_dimension_numbers<[1], [0], [0], [1], [0, 0, 1, 1], [], []>} : vector<4x32xf32>, vector<32x32xf32>, vector<4x32xf32> -> vector<4x32xf32>
    %c0_3 = arith.constant 0 : index
    %c0_4 = arith.constant 0 : index
    %3 = vector.load %arg3[%c0_3, %c0_4] : memref<1x32xf32, #tpu.memory_space<vmem>>, vector<1x32xf32>
    %4 = vector.broadcast %3 : vector<1x32xf32> to vector<4x32xf32>
    %5 = arith.addf %2, %4 : vector<4x32xf32>
    %cst_5 = arith.constant 0.000000e+00 : f32
    %6 = vector.broadcast %cst_5 : f32 to vector<4x32xf32>
    %c0_6 = arith.constant 0 : index
    %c0_7 = arith.constant 0 : index
    %7 = vector.load %arg0[%c0_6, %c0_7] : memref<36x16xf32, #tpu.memory_space<vmem>>, vector<36x16xf32>
    %c0_8 = arith.constant 0 : index
    %c0_9 = arith.constant 0 : index
    %8 = vector.load %arg4[%c0_8, %c0_9] : memref<16x128xf32, #tpu.memory_space<vmem>>, vector<16x128xf32>
    %cst_10 = arith.constant dense<0.000000e+00> : vector<36x128xf32>
    %9 = tpu.matmul %7, %8, %cst_10 {dimension_numbers = #tpu.dot_dimension_numbers<[1], [0], [0], [1], [0, 0, 1, 1], [], []>} : vector<36x16xf32>, vector<16x128xf32>, vector<36x128xf32> -> vector<36x128xf32>
    %c0_11 = arith.constant 0 : index
    %c0_12 = arith.constant 0 : index
    %10 = vector.load %arg6[%c0_11, %c0_12] : memref<1x128xf32, #tpu.memory_space<vmem>>, vector<1x128xf32>
    %11 = vector.broadcast %10 : vector<1x128xf32> to vector<36x128xf32>
    %12 = arith.addf %9, %11 : vector<36x128xf32>
    %c0_13 = arith.constant 0 : index
    %c0_14 = arith.constant 0 : index
    %13 = vector.load %arg5[%c0_13, %c0_14] : memref<32x128xf32, #tpu.memory_space<vmem>>, vector<32x128xf32>
    %14 = tpu.iota {dimensions = array<i32: 1>} : vector<1x128xi32>
    %c64_i32 = arith.constant 64 : i32
    %15 = vector.broadcast %c64_i32 : i32 to vector<1x128xi32>
    %16 = arith.cmpi sge, %14, %15 : vector<1x128xi32>
    %c96_i32 = arith.constant 96 : i32
    %17 = vector.broadcast %c96_i32 : i32 to vector<1x128xi32>
    %18 = arith.cmpi slt, %14, %17 : vector<1x128xi32>
    %19 = arith.andi %16, %18 : vector<1x128xi1>
    %cst_15 = arith.constant 1.000000e+00 : f32
    %cst_16 = arith.constant 5.000000e-01 : f32
    %20 = vector.broadcast %cst_15 : f32 to vector<1x128xf32>
    %21 = vector.broadcast %cst_16 : f32 to vector<1x128xf32>
    %22 = arith.select %19, %20, %21 : vector<1x128xi1>, vector<1x128xf32>
    %cst_17 = arith.constant 0.000000e+00 : f32
    %cst_18 = arith.constant 5.000000e-01 : f32
    %23 = vector.broadcast %cst_17 : f32 to vector<1x128xf32>
    %24 = vector.broadcast %cst_18 : f32 to vector<1x128xf32>
    %25 = arith.select %19, %23, %24 : vector<1x128xi1>, vector<1x128xf32>
    %26 = vector.extract_strided_slice %12 {offsets = [0, 0], sizes = [4, 128], strides = [1, 1]} : vector<36x128xf32> to vector<4x128xf32>
    %cst_19 = arith.constant dense<0.000000e+00> : vector<4x128xf32>
    %27 = tpu.matmul %5, %13, %cst_19 {dimension_numbers = #tpu.dot_dimension_numbers<[1], [0], [0], [1], [0, 0, 1, 1], [], []>} : vector<4x32xf32>, vector<32x128xf32>, vector<4x128xf32> -> vector<4x128xf32>
    %28 = arith.addf %26, %27 : vector<4x128xf32>
    %29 = vector.broadcast %22 : vector<1x128xf32> to vector<4x128xf32>
    %30 = arith.mulf %28, %29 : vector<4x128xf32>
    %31 = math.tanh %30 : vector<4x128xf32>
    %32 = vector.broadcast %22 : vector<1x128xf32> to vector<4x128xf32>
    %33 = arith.mulf %31, %32 : vector<4x128xf32>
    %34 = vector.broadcast %25 : vector<1x128xf32> to vector<4x128xf32>
    %35 = arith.addf %33, %34 : vector<4x128xf32>
    %36 = vector.extract_strided_slice %35 {offsets = [0, 0], sizes = [4, 32], strides = [1, 1]} : vector<4x128xf32> to vector<4x32xf32>
    %37 = vector.extract_strided_slice %35 {offsets = [0, 32], sizes = [4, 32], strides = [1, 1]} : vector<4x128xf32> to vector<4x32xf32>
    %38 = vector.extract_strided_slice %35 {offsets = [0, 64], sizes = [4, 32], strides = [1, 1]} : vector<4x128xf32> to vector<4x32xf32>
    %39 = vector.extract_strided_slice %35 {offsets = [0, 96], sizes = [4, 32], strides = [1, 1]} : vector<4x128xf32> to vector<4x32xf32>
    %40 = arith.mulf %37, %6 : vector<4x32xf32>
    %41 = arith.mulf %36, %38 : vector<4x32xf32>
    %42 = arith.addf %40, %41 : vector<4x32xf32>
    %43 = math.tanh %42 : vector<4x32xf32>
    %44 = arith.mulf %39, %43 : vector<4x32xf32>
    %c0_20 = arith.constant 0 : index
    %c0_21 = arith.constant 0 : index
    %45 = vector.load %arg12[%c0_20, %c0_21] : memref<36x32xf32, #tpu.memory_space<vmem>>, vector<4x32xf32>
    tpu.vector_store %arg12[%c0_20, %c0_21], %44 {strides = array<i32>} : memref<36x32xf32, #tpu.memory_space<vmem>>, vector<4x32xf32>,
    %46 = vector.extract_strided_slice %12 {offsets = [4, 0], sizes = [4, 128], strides = [1, 1]} : vector<36x128xf32> to vector<4x128xf32>
    %cst_22 = arith.constant dense<0.000000e+00> : vector<4x128xf32>
    %47 = tpu.matmul %44, %13, %cst_22 {dimension_numbers = #tpu.dot_dimension_numbers<[1], [0], [0], [1], [0, 0, 1, 1], [], []>} : vector<4x32xf32>, vector<32x128xf32>, vector<4x128xf32> -> vector<4x128xf32>
    %48 = arith.addf %46, %47 : vector<4x128xf32>
    %49 = vector.broadcast %22 : vector<1x128xf32> to vector<4x128xf32>
    %50 = arith.mulf %48, %49 : vector<4x128xf32>
    %51 = math.tanh %50 : vector<4x128xf32>
    %52 = vector.broadcast %22 : vector<1x128xf32> to vector<4x128xf32>
    %53 = arith.mulf %51, %52 : vector<4x128xf32>
    %54 = vector.broadcast %25 : vector<1x128xf32> to vector<4x128xf32>
    %55 = arith.addf %53, %54 : vector<4x128xf32>
    %56 = vector.extract_strided_slice %55 {offsets = [0, 0], sizes = [4, 32], strides = [1, 1]} : vector<4x128xf32> to vector<4x32xf32>
    %57 = vector.extract_strided_slice %55 {offsets = [0, 32], sizes = [4, 32], strides = [1, 1]} : vector<4x128xf32> to vector<4x32xf32>
    %58 = vector.extract_strided_slice %55 {offsets = [0, 64], sizes = [4, 32], strides = [1, 1]} : vector<4x128xf32> to vector<4x32xf32>
    %59 = vector.extract_strided_slice %55 {offsets = [0, 96], sizes = [4, 32], strides = [1, 1]} : vector<4x128xf32> to vector<4x32xf32>
    %60 = arith.mulf %57, %42 : vector<4x32xf32>
    %61 = arith.mulf %56, %58 : vector<4x32xf32>
    %62 = arith.addf %60, %61 : vector<4x32xf32>
    %63 = math.tanh %62 : vector<4x32xf32>
    %64 = arith.mulf %59, %63 : vector<4x32xf32>
    %c4 = arith.constant 4 : index
    %c0_23 = arith.constant 0 : index
    %65 = vector.load %arg12[%c4, %c0_23] : memref<36x32xf32, #tpu.memory_space<vmem>>, vector<4x32xf32>
    tpu.vector_store %arg12[%c4, %c0_23], %64 {strides = array<i32>} : memref<36x32xf32, #tpu.memory_space<vmem>>, vector<4x32xf32>,
    %66 = vector.extract_strided_slice %12 {offsets = [8, 0], sizes = [4, 128], strides = [1, 1]} : vector<36x128xf32> to vector<4x128xf32>
    %cst_24 = arith.constant dense<0.000000e+00> : vector<4x128xf32>
    %67 = tpu.matmul %64, %13, %cst_24 {dimension_numbers = #tpu.dot_dimension_numbers<[1], [0], [0], [1], [0, 0, 1, 1], [], []>} : vector<4x32xf32>, vector<32x128xf32>, vector<4x128xf32> -> vector<4x128xf32>
    %68 = arith.addf %66, %67 : vector<4x128xf32>
    %69 = vector.broadcast %22 : vector<1x128xf32> to vector<4x128xf32>
    %70 = arith.mulf %68, %69 : vector<4x128xf32>
    %71 = math.tanh %70 : vector<4x128xf32>
    %72 = vector.broadcast %22 : vector<1x128xf32> to vector<4x128xf32>
    %73 = arith.mulf %71, %72 : vector<4x128xf32>
    %74 = vector.broadcast %25 : vector<1x128xf32> to vector<4x128xf32>
    %75 = arith.addf %73, %74 : vector<4x128xf32>
    %76 = vector.extract_strided_slice %75 {offsets = [0, 0], sizes = [4, 32], strides = [1, 1]} : vector<4x128xf32> to vector<4x32xf32>
    %77 = vector.extract_strided_slice %75 {offsets = [0, 32], sizes = [4, 32], strides = [1, 1]} : vector<4x128xf32> to vector<4x32xf32>
    %78 = vector.extract_strided_slice %75 {offsets = [0, 64], sizes = [4, 32], strides = [1, 1]} : vector<4x128xf32> to vector<4x32xf32>
    %79 = vector.extract_strided_slice %75 {offsets = [0, 96], sizes = [4, 32], strides = [1, 1]} : vector<4x128xf32> to vector<4x32xf32>
    %80 = arith.mulf %77, %62 : vector<4x32xf32>
    %81 = arith.mulf %76, %78 : vector<4x32xf32>
    %82 = arith.addf %80, %81 : vector<4x32xf32>
    %83 = math.tanh %82 : vector<4x32xf32>
    %84 = arith.mulf %79, %83 : vector<4x32xf32>
    %c8 = arith.constant 8 : index
    %c0_25 = arith.constant 0 : index
    %85 = vector.load %arg12[%c8, %c0_25] : memref<36x32xf32, #tpu.memory_space<vmem>>, vector<4x32xf32>
    tpu.vector_store %arg12[%c8, %c0_25], %84 {strides = array<i32>} : memref<36x32xf32, #tpu.memory_space<vmem>>, vector<4x32xf32>,
    %86 = vector.extract_strided_slice %12 {offsets = [12, 0], sizes = [4, 128], strides = [1, 1]} : vector<36x128xf32> to vector<4x128xf32>
    %cst_26 = arith.constant dense<0.000000e+00> : vector<4x128xf32>
    %87 = tpu.matmul %84, %13, %cst_26 {dimension_numbers = #tpu.dot_dimension_numbers<[1], [0], [0], [1], [0, 0, 1, 1], [], []>} : vector<4x32xf32>, vector<32x128xf32>, vector<4x128xf32> -> vector<4x128xf32>
    %88 = arith.addf %86, %87 : vector<4x128xf32>
    %89 = vector.broadcast %22 : vector<1x128xf32> to vector<4x128xf32>
    %90 = arith.mulf %88, %89 : vector<4x128xf32>
    %91 = math.tanh %90 : vector<4x128xf32>
    %92 = vector.broadcast %22 : vector<1x128xf32> to vector<4x128xf32>
    %93 = arith.mulf %91, %92 : vector<4x128xf32>
    %94 = vector.broadcast %25 : vector<1x128xf32> to vector<4x128xf32>
    %95 = arith.addf %93, %94 : vector<4x128xf32>
    %96 = vector.extract_strided_slice %95 {offsets = [0, 0], sizes = [4, 32], strides = [1, 1]} : vector<4x128xf32> to vector<4x32xf32>
    %97 = vector.extract_strided_slice %95 {offsets = [0, 32], sizes = [4, 32], strides = [1, 1]} : vector<4x128xf32> to vector<4x32xf32>
    %98 = vector.extract_strided_slice %95 {offsets = [0, 64], sizes = [4, 32], strides = [1, 1]} : vector<4x128xf32> to vector<4x32xf32>
    %99 = vector.extract_strided_slice %95 {offsets = [0, 96], sizes = [4, 32], strides = [1, 1]} : vector<4x128xf32> to vector<4x32xf32>
    %100 = arith.mulf %97, %82 : vector<4x32xf32>
    %101 = arith.mulf %96, %98 : vector<4x32xf32>
    %102 = arith.addf %100, %101 : vector<4x32xf32>
    %103 = math.tanh %102 : vector<4x32xf32>
    %104 = arith.mulf %99, %103 : vector<4x32xf32>
    %c12 = arith.constant 12 : index
    %c0_27 = arith.constant 0 : index
    %105 = vector.load %arg12[%c12, %c0_27] : memref<36x32xf32, #tpu.memory_space<vmem>>, vector<4x32xf32>
    tpu.vector_store %arg12[%c12, %c0_27], %104 {strides = array<i32>} : memref<36x32xf32, #tpu.memory_space<vmem>>, vector<4x32xf32>,
    %106 = vector.extract_strided_slice %12 {offsets = [16, 0], sizes = [4, 128], strides = [1, 1]} : vector<36x128xf32> to vector<4x128xf32>
    %cst_28 = arith.constant dense<0.000000e+00> : vector<4x128xf32>
    %107 = tpu.matmul %104, %13, %cst_28 {dimension_numbers = #tpu.dot_dimension_numbers<[1], [0], [0], [1], [0, 0, 1, 1], [], []>} : vector<4x32xf32>, vector<32x128xf32>, vector<4x128xf32> -> vector<4x128xf32>
    %108 = arith.addf %106, %107 : vector<4x128xf32>
    %109 = vector.broadcast %22 : vector<1x128xf32> to vector<4x128xf32>
    %110 = arith.mulf %108, %109 : vector<4x128xf32>
    %111 = math.tanh %110 : vector<4x128xf32>
    %112 = vector.broadcast %22 : vector<1x128xf32> to vector<4x128xf32>
    %113 = arith.mulf %111, %112 : vector<4x128xf32>
    %114 = vector.broadcast %25 : vector<1x128xf32> to vector<4x128xf32>
    %115 = arith.addf %113, %114 : vector<4x128xf32>
    %116 = vector.extract_strided_slice %115 {offsets = [0, 0], sizes = [4, 32], strides = [1, 1]} : vector<4x128xf32> to vector<4x32xf32>
    %117 = vector.extract_strided_slice %115 {offsets = [0, 32], sizes = [4, 32], strides = [1, 1]} : vector<4x128xf32> to vector<4x32xf32>
    %118 = vector.extract_strided_slice %115 {offsets = [0, 64], sizes = [4, 32], strides = [1, 1]} : vector<4x128xf32> to vector<4x32xf32>
    %119 = vector.extract_strided_slice %115 {offsets = [0, 96], sizes = [4, 32], strides = [1, 1]} : vector<4x128xf32> to vector<4x32xf32>
    %120 = arith.mulf %117, %102 : vector<4x32xf32>
    %121 = arith.mulf %116, %118 : vector<4x32xf32>
    %122 = arith.addf %120, %121 : vector<4x32xf32>
    %123 = math.tanh %122 : vector<4x32xf32>
    %124 = arith.mulf %119, %123 : vector<4x32xf32>
    %c16 = arith.constant 16 : index
    %c0_29 = arith.constant 0 : index
    %125 = vector.load %arg12[%c16, %c0_29] : memref<36x32xf32, #tpu.memory_space<vmem>>, vector<4x32xf32>
    tpu.vector_store %arg12[%c16, %c0_29], %124 {strides = array<i32>} : memref<36x32xf32, #tpu.memory_space<vmem>>, vector<4x32xf32>,
    %126 = vector.extract_strided_slice %12 {offsets = [20, 0], sizes = [4, 128], strides = [1, 1]} : vector<36x128xf32> to vector<4x128xf32>
    %cst_30 = arith.constant dense<0.000000e+00> : vector<4x128xf32>
    %127 = tpu.matmul %124, %13, %cst_30 {dimension_numbers = #tpu.dot_dimension_numbers<[1], [0], [0], [1], [0, 0, 1, 1], [], []>} : vector<4x32xf32>, vector<32x128xf32>, vector<4x128xf32> -> vector<4x128xf32>
    %128 = arith.addf %126, %127 : vector<4x128xf32>
    %129 = vector.broadcast %22 : vector<1x128xf32> to vector<4x128xf32>
    %130 = arith.mulf %128, %129 : vector<4x128xf32>
    %131 = math.tanh %130 : vector<4x128xf32>
    %132 = vector.broadcast %22 : vector<1x128xf32> to vector<4x128xf32>
    %133 = arith.mulf %131, %132 : vector<4x128xf32>
    %134 = vector.broadcast %25 : vector<1x128xf32> to vector<4x128xf32>
    %135 = arith.addf %133, %134 : vector<4x128xf32>
    %136 = vector.extract_strided_slice %135 {offsets = [0, 0], sizes = [4, 32], strides = [1, 1]} : vector<4x128xf32> to vector<4x32xf32>
    %137 = vector.extract_strided_slice %135 {offsets = [0, 32], sizes = [4, 32], strides = [1, 1]} : vector<4x128xf32> to vector<4x32xf32>
    %138 = vector.extract_strided_slice %135 {offsets = [0, 64], sizes = [4, 32], strides = [1, 1]} : vector<4x128xf32> to vector<4x32xf32>
    %139 = vector.extract_strided_slice %135 {offsets = [0, 96], sizes = [4, 32], strides = [1, 1]} : vector<4x128xf32> to vector<4x32xf32>
    %140 = arith.mulf %137, %122 : vector<4x32xf32>
    %141 = arith.mulf %136, %138 : vector<4x32xf32>
    %142 = arith.addf %140, %141 : vector<4x32xf32>
    %143 = math.tanh %142 : vector<4x32xf32>
    %144 = arith.mulf %139, %143 : vector<4x32xf32>
    %c20 = arith.constant 20 : index
    %c0_31 = arith.constant 0 : index
    %145 = vector.load %arg12[%c20, %c0_31] : memref<36x32xf32, #tpu.memory_space<vmem>>, vector<4x32xf32>
    tpu.vector_store %arg12[%c20, %c0_31], %144 {strides = array<i32>} : memref<36x32xf32, #tpu.memory_space<vmem>>, vector<4x32xf32>,
    %146 = vector.extract_strided_slice %12 {offsets = [24, 0], sizes = [4, 128], strides = [1, 1]} : vector<36x128xf32> to vector<4x128xf32>
    %cst_32 = arith.constant dense<0.000000e+00> : vector<4x128xf32>
    %147 = tpu.matmul %144, %13, %cst_32 {dimension_numbers = #tpu.dot_dimension_numbers<[1], [0], [0], [1], [0, 0, 1, 1], [], []>} : vector<4x32xf32>, vector<32x128xf32>, vector<4x128xf32> -> vector<4x128xf32>
    %148 = arith.addf %146, %147 : vector<4x128xf32>
    %149 = vector.broadcast %22 : vector<1x128xf32> to vector<4x128xf32>
    %150 = arith.mulf %148, %149 : vector<4x128xf32>
    %151 = math.tanh %150 : vector<4x128xf32>
    %152 = vector.broadcast %22 : vector<1x128xf32> to vector<4x128xf32>
    %153 = arith.mulf %151, %152 : vector<4x128xf32>
    %154 = vector.broadcast %25 : vector<1x128xf32> to vector<4x128xf32>
    %155 = arith.addf %153, %154 : vector<4x128xf32>
    %156 = vector.extract_strided_slice %155 {offsets = [0, 0], sizes = [4, 32], strides = [1, 1]} : vector<4x128xf32> to vector<4x32xf32>
    %157 = vector.extract_strided_slice %155 {offsets = [0, 32], sizes = [4, 32], strides = [1, 1]} : vector<4x128xf32> to vector<4x32xf32>
    %158 = vector.extract_strided_slice %155 {offsets = [0, 64], sizes = [4, 32], strides = [1, 1]} : vector<4x128xf32> to vector<4x32xf32>
    %159 = vector.extract_strided_slice %155 {offsets = [0, 96], sizes = [4, 32], strides = [1, 1]} : vector<4x128xf32> to vector<4x32xf32>
    %160 = arith.mulf %157, %142 : vector<4x32xf32>
    %161 = arith.mulf %156, %158 : vector<4x32xf32>
    %162 = arith.addf %160, %161 : vector<4x32xf32>
    %163 = math.tanh %162 : vector<4x32xf32>
    %164 = arith.mulf %159, %163 : vector<4x32xf32>
    %c24 = arith.constant 24 : index
    %c0_33 = arith.constant 0 : index
    %165 = vector.load %arg12[%c24, %c0_33] : memref<36x32xf32, #tpu.memory_space<vmem>>, vector<4x32xf32>
    tpu.vector_store %arg12[%c24, %c0_33], %164 {strides = array<i32>} : memref<36x32xf32, #tpu.memory_space<vmem>>, vector<4x32xf32>,
    %166 = vector.extract_strided_slice %12 {offsets = [28, 0], sizes = [4, 128], strides = [1, 1]} : vector<36x128xf32> to vector<4x128xf32>
    %cst_34 = arith.constant dense<0.000000e+00> : vector<4x128xf32>
    %167 = tpu.matmul %164, %13, %cst_34 {dimension_numbers = #tpu.dot_dimension_numbers<[1], [0], [0], [1], [0, 0, 1, 1], [], []>} : vector<4x32xf32>, vector<32x128xf32>, vector<4x128xf32> -> vector<4x128xf32>
    %168 = arith.addf %166, %167 : vector<4x128xf32>
    %169 = vector.broadcast %22 : vector<1x128xf32> to vector<4x128xf32>
    %170 = arith.mulf %168, %169 : vector<4x128xf32>
    %171 = math.tanh %170 : vector<4x128xf32>
    %172 = vector.broadcast %22 : vector<1x128xf32> to vector<4x128xf32>
    %173 = arith.mulf %171, %172 : vector<4x128xf32>
    %174 = vector.broadcast %25 : vector<1x128xf32> to vector<4x128xf32>
    %175 = arith.addf %173, %174 : vector<4x128xf32>
    %176 = vector.extract_strided_slice %175 {offsets = [0, 0], sizes = [4, 32], strides = [1, 1]} : vector<4x128xf32> to vector<4x32xf32>
    %177 = vector.extract_strided_slice %175 {offsets = [0, 32], sizes = [4, 32], strides = [1, 1]} : vector<4x128xf32> to vector<4x32xf32>
    %178 = vector.extract_strided_slice %175 {offsets = [0, 64], sizes = [4, 32], strides = [1, 1]} : vector<4x128xf32> to vector<4x32xf32>
    %179 = vector.extract_strided_slice %175 {offsets = [0, 96], sizes = [4, 32], strides = [1, 1]} : vector<4x128xf32> to vector<4x32xf32>
    %180 = arith.mulf %177, %162 : vector<4x32xf32>
    %181 = arith.mulf %176, %178 : vector<4x32xf32>
    %182 = arith.addf %180, %181 : vector<4x32xf32>
    %183 = math.tanh %182 : vector<4x32xf32>
    %184 = arith.mulf %179, %183 : vector<4x32xf32>
    %c28 = arith.constant 28 : index
    %c0_35 = arith.constant 0 : index
    %185 = vector.load %arg12[%c28, %c0_35] : memref<36x32xf32, #tpu.memory_space<vmem>>, vector<4x32xf32>
    tpu.vector_store %arg12[%c28, %c0_35], %184 {strides = array<i32>} : memref<36x32xf32, #tpu.memory_space<vmem>>, vector<4x32xf32>,
    %186 = vector.extract_strided_slice %12 {offsets = [32, 0], sizes = [4, 128], strides = [1, 1]} : vector<36x128xf32> to vector<4x128xf32>
    %cst_36 = arith.constant dense<0.000000e+00> : vector<4x128xf32>
    %187 = tpu.matmul %184, %13, %cst_36 {dimension_numbers = #tpu.dot_dimension_numbers<[1], [0], [0], [1], [0, 0, 1, 1], [], []>} : vector<4x32xf32>, vector<32x128xf32>, vector<4x128xf32> -> vector<4x128xf32>
    %188 = arith.addf %186, %187 : vector<4x128xf32>
    %189 = vector.broadcast %22 : vector<1x128xf32> to vector<4x128xf32>
    %190 = arith.mulf %188, %189 : vector<4x128xf32>
    %191 = math.tanh %190 : vector<4x128xf32>
    %192 = vector.broadcast %22 : vector<1x128xf32> to vector<4x128xf32>
    %193 = arith.mulf %191, %192 : vector<4x128xf32>
    %194 = vector.broadcast %25 : vector<1x128xf32> to vector<4x128xf32>
    %195 = arith.addf %193, %194 : vector<4x128xf32>
    %196 = vector.extract_strided_slice %195 {offsets = [0, 0], sizes = [4, 32], strides = [1, 1]} : vector<4x128xf32> to vector<4x32xf32>
    %197 = vector.extract_strided_slice %195 {offsets = [0, 32], sizes = [4, 32], strides = [1, 1]} : vector<4x128xf32> to vector<4x32xf32>
    %198 = vector.extract_strided_slice %195 {offsets = [0, 64], sizes = [4, 32], strides = [1, 1]} : vector<4x128xf32> to vector<4x32xf32>
    %199 = vector.extract_strided_slice %195 {offsets = [0, 96], sizes = [4, 32], strides = [1, 1]} : vector<4x128xf32> to vector<4x32xf32>
    %200 = arith.mulf %197, %182 : vector<4x32xf32>
    %201 = arith.mulf %196, %198 : vector<4x32xf32>
    %202 = arith.addf %200, %201 : vector<4x32xf32>
    %203 = math.tanh %202 : vector<4x32xf32>
    %204 = arith.mulf %199, %203 : vector<4x32xf32>
    %c32 = arith.constant 32 : index
    %c0_37 = arith.constant 0 : index
    %205 = vector.load %arg12[%c32, %c0_37] : memref<36x32xf32, #tpu.memory_space<vmem>>, vector<4x32xf32>
    tpu.vector_store %arg12[%c32, %c0_37], %204 {strides = array<i32>} : memref<36x32xf32, #tpu.memory_space<vmem>>, vector<4x32xf32>,
    %c0_38 = arith.constant 0 : index
    %c0_39 = arith.constant 0 : index
    %206 = vector.load %arg12[%c0_38, %c0_39] : memref<36x32xf32, #tpu.memory_space<vmem>>, vector<36x32xf32>
    %c0_40 = arith.constant 0 : index
    %c0_41 = arith.constant 0 : index
    %207 = vector.load %arg7[%c0_40, %c0_41] : memref<32x32xf32, #tpu.memory_space<vmem>>, vector<32x32xf32>
    %cst_42 = arith.constant dense<0.000000e+00> : vector<36x32xf32>
    %208 = tpu.matmul %206, %207, %cst_42 {dimension_numbers = #tpu.dot_dimension_numbers<[1], [0], [0], [1], [0, 0, 1, 1], [], []>} : vector<36x32xf32>, vector<32x32xf32>, vector<36x32xf32> -> vector<36x32xf32>
    %c0_43 = arith.constant 0 : index
    %c0_44 = arith.constant 0 : index
    %209 = vector.load %arg8[%c0_43, %c0_44] : memref<1x32xf32, #tpu.memory_space<vmem>>, vector<1x32xf32>
    %210 = vector.broadcast %209 : vector<1x32xf32> to vector<36x32xf32>
    %211 = arith.addf %208, %210 : vector<36x32xf32>
    %c0_45 = arith.constant 0 : index
    %c0_46 = arith.constant 0 : index
    %212 = vector.load %arg9[%c0_45, %c0_46] : memref<36x32xf32, #tpu.memory_space<vmem>>, vector<36x32xf32>
    tpu.vector_store %arg9[%c0_45, %c0_46], %211 {strides = array<i32>} : memref<36x32xf32, #tpu.memory_space<vmem>>, vector<36x32xf32>,
    %c0_47 = arith.constant 0 : index
    %c0_48 = arith.constant 0 : index
    %213 = vector.load %arg10[%c0_47, %c0_48] : memref<4x32xf32, #tpu.memory_space<vmem>>, vector<4x32xf32>
    tpu.vector_store %arg10[%c0_47, %c0_48], %204 {strides = array<i32>} : memref<4x32xf32, #tpu.memory_space<vmem>>, vector<4x32xf32>,
    %c0_49 = arith.constant 0 : index
    %c0_50 = arith.constant 0 : index
    %214 = vector.load %arg11[%c0_49, %c0_50] : memref<4x32xf32, #tpu.memory_space<vmem>>, vector<4x32xf32>
    tpu.vector_store %arg11[%c0_49, %c0_50], %202 {strides = array<i32>} : memref<4x32xf32, #tpu.memory_space<vmem>>, vector<4x32xf32>,
    return
  }
}

</mosaic_0001>

<llo_original>
// kernel: tpu_custom_call.1
$region0: #{tpu_custom_call.1}
  #allocation0 [shape = 'u32[]', space=smem, size = 0x4, offset = 0x4, fixed_abs, tag = 'smem constant byte address 0x4 - core index']
  #allocation1 [shape = 'u32[144,128]{1,0:T(1,128)}', space=vmem, size = 0x12000, scoped, tag = 'internal scratch']
  #allocation2 [shape = 'f32[36,32]{1,0:T(8,128)}', space=vmem, size = 0x5000, scoped, tag = 'scratch operand']
  %s0 = inlined_call_operand.vmem [shape: f32[36,16], index: 0, kind: input, shape index: {}]
  %s1 = inlined_call_operand.hbm [shape: f32[4,32], index: 1, kind: input, shape index: {}]
  %s2 = inlined_call_operand.vmem [shape: f32[32,32], index: 2, kind: input, shape index: {}]
  %s3 = inlined_call_operand.vmem [shape: f32[1,32], index: 3, kind: input, shape index: {}]
  %s4 = inlined_call_operand.hbm [shape: f32[16,128], index: 4, kind: input, shape index: {}]
  %s5 = inlined_call_operand.vmem [shape: f32[32,128], index: 5, kind: input, shape index: {}]
  %s6 = inlined_call_operand.vmem [shape: f32[1,128], index: 6, kind: input, shape index: {}]
  %s7 = inlined_call_operand.hbm [shape: f32[32,32], index: 7, kind: input, shape index: {}]
  %s8 = inlined_call_operand.vmem [shape: f32[1,32], index: 8, kind: input, shape index: {}]
  %s9 = inlined_call_operand.vmem [shape: f32[36,32], index: 9, kind: output, shape index: {0}]
  %s10 = inlined_call_operand.hbm [shape: f32[4,32], index: 10, kind: output, shape index: {1}]
  %s11 = inlined_call_operand.hbm [shape: f32[4,32], index: 11, kind: output, shape index: {2}]
  %12 = xla_tuple %s9, %s10, %s11
  %s13 = sld [smem:[#allocation0]]
  $region74: #{tpu_custom_call.1} parent=0
    _
  %s15 = ssub.s32 1, %s13
  %s16 = scalar_select 0, %s15, %s13
  $region1: #{tpu_custom_call.1} parent=0
    #allocation3 [shape = 'u8[2048]{0}', space=vmem, size = 0x800, scoped, tag = 'input window, operand 1, single buffered']
    #allocation4 [shape = 's32[1]{0}', space=sflag, size = 0x4, scoped, tag = 'scoped memory for tpu_custom_call.1']
    #allocation5 [shape = 's32[1]{0}', space=sflag, size = 0x4, scoped, tag = 'scoped memory for tpu_custom_call.1']
    #allocation6 [shape = 'u8[8192]{0}', space=vmem, size = 0x2000, scoped, tag = 'input window, operand 4, single buffered']
    #allocation7 [shape = 's32[1]{0}', space=sflag, size = 0x4, scoped, tag = 'scoped memory for tpu_custom_call.1']
    #allocation8 [shape = 'u8[16384]{0}', space=vmem, size = 0x4000, scoped, tag = 'input window, operand 7, single buffered']
    #allocation9 [shape = 'u8[2048]{0}', space=vmem, size = 0x800, scoped, tag = 'output window, operand 1, single buffered']
    #allocation10 [shape = 'u8[2048]{0}', space=vmem, size = 0x800, scoped, tag = 'output window, operand 2, single buffered']
    #allocation11 [shape = 's32[1]{0}', space=sflag, size = 0x4, scoped, tag = 'scoped memory for tpu_custom_call.1']
    %17 = vsyncpa [#allocation4], 0
    %18 = vsyncpa [#allocation7], 0
    %19 = vsyncpa [#allocation5], 0
    %20 = vsyncpa [#allocation11], 0
    // Predicated region
    $region2: #{tpu_custom_call.1} parent=1 // pred_check
      _
    $region3: #{tpu_custom_call.1} parent=1 // pred_check_branch
      %22 = sbr.rel (0) target = $region5
    $region4: #{tpu_custom_call.1} parent=1 // pred_region
      _
    $region5: #{tpu_custom_call.1} parent=1 // pred_fallthru
      _
    // Predicated region
    $region6: #{tpu_custom_call.1} parent=1 // pred_check
      _
    $region7: #{tpu_custom_call.1} parent=1 // pred_check_branch
      %24 = sbr.rel (0) target = $region9
    $region8: #{tpu_custom_call.1} parent=1 // pred_region
      %s26 = ssub.s32 64, 64
      %27 = vsyncadd [#allocation4], %s26
      %s29 = sshll.u32 [#allocation3], 4
      %s30 = int_to_ptr.vmem [resolvable:$true] %s29
      %32 = dma.hbm_to_vmem [thread:$0]  %s1, 64, %s30, [#allocation4]
    $region9: #{tpu_custom_call.1} parent=1 // pred_fallthru
      _
    // Predicated region
    $region10: #{tpu_custom_call.1} parent=1 // pred_check
      _
    $region11: #{tpu_custom_call.1} parent=1 // pred_check_branch
      %34 = sbr.rel (0) target = $region13
    $region12: #{tpu_custom_call.1} parent=1 // pred_region
      _
    $region13: #{tpu_custom_call.1} parent=1 // pred_fallthru
      _
    // Predicated region
    $region14: #{tpu_custom_call.1} parent=1 // pred_check
      _
    $region15: #{tpu_custom_call.1} parent=1 // pred_check_branch
      %36 = sbr.rel (0) target = $region17
    $region16: #{tpu_custom_call.1} parent=1 // pred_region
      _
    $region17: #{tpu_custom_call.1} parent=1 // pred_fallthru
      _
    // Predicated region
    $region18: #{tpu_custom_call.1} parent=1 // pred_check
      _
    $region19: #{tpu_custom_call.1} parent=1 // pred_check_branch
      %38 = sbr.rel (0) target = $region21
    $region20: #{tpu_custom_call.1} parent=1 // pred_region
      %s40 = ssub.s32 256, 256
      %41 = vsyncadd [#allocation7], %s40
      %s42 = sshll.u32 [#allocation6], 4
      %s43 = int_to_ptr.vmem [resolvable:$true] %s42
      %48 = dma.hbm_to_vmem [thread:$0]  %s4, 256, %s43, [#allocation7], 128, 128, 8
    $region21: #{tpu_custom_call.1} parent=1 // pred_fallthru
      _
    // Predicated region
    $region22: #{tpu_custom_call.1} parent=1 // pred_check
      _
    $region23: #{tpu_custom_call.1} parent=1 // pred_check_branch
      %50 = sbr.rel (0) target = $region25
    $region24: #{tpu_custom_call.1} parent=1 // pred_region
      _
    $region25: #{tpu_custom_call.1} parent=1 // pred_fallthru
      _
    // Predicated region
    $region26: #{tpu_custom_call.1} parent=1 // pred_check
      _
    $region27: #{tpu_custom_call.1} parent=1 // pred_check_branch
      %52 = sbr.rel (0) target = $region29
    $region28: #{tpu_custom_call.1} parent=1 // pred_region
      _
    $region29: #{tpu_custom_call.1} parent=1 // pred_fallthru
      _
    // Predicated region
    $region30: #{tpu_custom_call.1} parent=1 // pred_check
      _
    $region31: #{tpu_custom_call.1} parent=1 // pred_check_branch
      %54 = sbr.rel (0) target = $region33
    $region32: #{tpu_custom_call.1} parent=1 // pred_region
      %s56 = ssub.s32 512, 512
      %57 = vsyncadd [#allocation7], %s56
      %s58 = sshll.u32 [#allocation8], 4
      %s59 = int_to_ptr.vmem [resolvable:$true] %s58
      %64 = dma.hbm_to_vmem [thread:$0]  %s7, 512, %s59, [#allocation7], 128, 128, 8
    $region33: #{tpu_custom_call.1} parent=1 // pred_fallthru
      _
    // Predicated region
    $region34: #{tpu_custom_call.1} parent=1 // pred_check
      _
    $region35: #{tpu_custom_call.1} parent=1 // pred_check_branch
      %66 = sbr.rel (0) target = $region37
    $region36: #{tpu_custom_call.1} parent=1 // pred_region
      _
    $region37: #{tpu_custom_call.1} parent=1 // pred_fallthru
      _
    // Predicated region
    $region38: #{tpu_custom_call.1} parent=1 // pred_check
      _
    $region39: #{tpu_custom_call.1} parent=1 // pred_check_branch
      %68 = sbr.rel (0) target = $region41
    $region40: #{tpu_custom_call.1} parent=1 // pred_region
      %69 = dma.done [#allocation4], 64
    $region41: #{tpu_custom_call.1} parent=1 // pred_fallthru
      _
    // Predicated region
    $region42: #{tpu_custom_call.1} parent=1 // pred_check
      _
    $region43: #{tpu_custom_call.1} parent=1 // pred_check_branch
      %71 = sbr.rel (0) target = $region45
    $region44: #{tpu_custom_call.1} parent=1 // pred_region
      %72 = dma.done [#allocation7], 256
    $region45: #{tpu_custom_call.1} parent=1 // pred_fallthru
      _
    // Predicated region
    $region46: #{tpu_custom_call.1} parent=1 // pred_check
      _
    $region47: #{tpu_custom_call.1} parent=1 // pred_check_branch
      %74 = sbr.rel (0) target = $region49
    $region48: #{tpu_custom_call.1} parent=1 // pred_region
      %75 = dma.done [#allocation7], 512
    $region49: #{tpu_custom_call.1} parent=1 // pred_fallthru
      _
    %v76 = vld [vmem:[#allocation3] sm:$0xf]
    %v77 = vld [vmem:[%s2] sm:$0xff]
    %v78 = vld [vmem:[%s2 + $0x8] sm:$0xff]
    %v79 = vld [vmem:[%s2 + $0x10] sm:$0xff]
    %v80 = vld [vmem:[%s2 + $0x18] sm:$0xff]
    %v81 = vld [vmem:[%s3] sm:$0x1]
    %v83 = vlaneseq
    %v84 = vshrl.u32 %v83, 7
    %v85 = vsub.s32 0, %v84
    %v86 = vrot.slane %v81, %v85
    %vm88 = vcmask 261120
    %v90 = vsel %vm88, %v76, 0
    %92 = vmatprep.subr.mxu0 0.0
    %93 = vmatpush1.msra.mxu0 %v77
    %94 = vmatprep.subr.mxu0 0.0
    %95 = vmatpush1.msra.mxu0 %v78
    %96 = vmatprep.subr.mxu0 0.0
    %97 = vmatpush1.msra.mxu0 %v79
    %98 = vmatprep.subr.mxu0 0.0
    %99 = vmatpush1.msra.mxu0 %v80
    %100 = vmatprep.subr.mxu0 0.0
    %101 = vmatpush1.msra.mxu0 0.0
    %102 = vmatprep.subr.mxu0 0.0
    %103 = vmatpush1.msra.mxu0 0.0
    %104 = vmatprep.subr.mxu0 0.0
    %105 = vmatpush1.msra.mxu0 0.0
    %106 = vmatprep.subr.mxu0 0.0
    %107 = vmatpush1.msra.mxu0 0.0
    %108 = vmatprep.subr.mxu0 0.0
    %109 = vmatpush1.msra.mxu0 0.0
    %110 = vmatprep.subr.mxu0 0.0
    %111 = vmatpush1.msra.mxu0 0.0
    %112 = vmatprep.subr.mxu0 0.0
    %113 = vmatpush1.msra.mxu0 0.0
    %114 = vmatprep.subr.mxu0 0.0
    %115 = vmatpush1.msra.mxu0 0.0
    %116 = vmatprep.subr.mxu0 0.0
    %117 = vmatpush1.msra.mxu0 0.0
    %118 = vmatprep.subr.mxu0 0.0
    %119 = vmatpush1.msra.mxu0 0.0
    %120 = vmatprep.subr.mxu0 0.0
    %121 = vmatpush1.msra.mxu0 0.0
    %122 = vmatprep.subr.mxu0 0.0
    %123 = vmatpush1.msra.mxu0 0.0
    %124 = vmatprep.subr.mxu0 0.0
    %125 = vmatpush1.msra.mxu0 0.0
    %126 = vmatprep.subr.mxu0 0.0
    %127 = vmatpush1.msra.mxu0 0.0
    %128 = vmatprep.subr.mxu0 0.0
    %129 = vmatpush1.msra.mxu0 0.0
    %130 = vmatprep.subr.mxu0 0.0
    %131 = vmatpush1.msra.mxu0 0.0
    %132 = vmatprep.subr.mxu0 0.0
    %133 = vmatpush1.msra.mxu0 0.0
    %134 = vmatprep.subr.mxu0 0.0
    %135 = vmatpush1.msra.mxu0 0.0
    %136 = vmatprep.subr.mxu0 0.0
    %137 = vmatpush1.msra.mxu0 0.0
    %138 = vmatprep.subr.mxu0 0.0
    %139 = vmatpush1.msra.mxu0 0.0
    %140 = vmatprep.subr.mxu0 0.0
    %141 = vmatpush1.msra.mxu0 0.0
    %142 = vmatprep.subr.mxu0 0.0
    %143 = vmatpush1.msra.mxu0 0.0
    %144 = vmatprep.subr.mxu0 0.0
    %145 = vmatpush1.msra.mxu0 0.0
    %146 = vmatprep.subr.mxu0 0.0
    %147 = vmatpush1.msra.mxu0 0.0
    %148 = vmatprep.subr.mxu0 0.0
    %149 = vmatpush1.msra.mxu0 0.0
    %150 = vmatprep.subr.mxu0 0.0
    %151 = vmatpush1.msra.mxu0 0.0
    %152 = vmatprep.subr.mxu0 0.0
    %153 = vmatpush1.msra.mxu0 0.0
    %154 = vmatprep.subr.mxu0 0.0
    %155 = vmatpush1.msra.mxu0 0.0
    %156 = vmatprep.mubr.f32.mxu0 0.0
    %157 = vmatmul.mubr.f32.gmra.mrb[0].mxu0 %v90
    %v158 = vpop.f32.mrb[0].mxu0
    %v159 = vadd.f32 %v86, %v158
    %v160 = vpop.f32.mrb[0].mxu0
    %161 = vdwg.mxu0
    %v162 = vld [vmem:[%s0] sm:$0xff]
    %v163 = vld [vmem:[%s0 + $0x8] sm:$0xff]
    %v164 = vld [vmem:[%s0 + $0x10] sm:$0xff]
    %v165 = vld [vmem:[%s0 + $0x18] sm:$0xff]
    %v166 = vld [vmem:[%s0 + $0x20] sm:$0xf]
    %v167 = vld [vmem:[#allocation6] sm:$0xff]
    %v168 = vld [vmem:[#allocation6 + $0x8] sm:$0xff]
    %v169 = vld [vmem:[%s6] sm:$0x1]
    %v171 = vlaneseq
    %v172 = vshrl.u32 %v171, 7
    %v173 = vsub.s32 0, %v172
    %v174 = vrot.slane %v169, %v173
    %vm176 = vcmask 130048
    %v178 = vsel %vm176, %v162, 0
    %v181 = vsel %vm176, %v163, 0
    %v184 = vsel %vm176, %v164, 0
    %v187 = vsel %vm176, %v165, 0
    %v190 = vsel %vm176, %v166, 0
    %192 = vmatprep.subr.mxu0 0.0
    %193 = vmatpush1.msra.mxu0 %v167
    %194 = vmatprep.subr.mxu0 0.0
    %195 = vmatpush1.msra.mxu0 %v168
    %196 = vmatprep.subr.mxu0 0.0
    %197 = vmatpush1.msra.mxu0 0.0
    %198 = vmatprep.subr.mxu0 0.0
    %199 = vmatpush1.msra.mxu0 0.0
    %200 = vmatprep.subr.mxu0 0.0
    %201 = vmatpush1.msra.mxu0 0.0
    %202 = vmatprep.subr.mxu0 0.0
    %203 = vmatpush1.msra.mxu0 0.0
    %204 = vmatprep.subr.mxu0 0.0
    %205 = vmatpush1.msra.mxu0 0.0
    %206 = vmatprep.subr.mxu0 0.0
    %207 = vmatpush1.msra.mxu0 0.0
    %208 = vmatprep.subr.mxu0 0.0
    %209 = vmatpush1.msra.mxu0 0.0
    %210 = vmatprep.subr.mxu0 0.0
    %211 = vmatpush1.msra.mxu0 0.0
    %212 = vmatprep.subr.mxu0 0.0
    %213 = vmatpush1.msra.mxu0 0.0
    %214 = vmatprep.subr.mxu0 0.0
    %215 = vmatpush1.msra.mxu0 0.0
    %216 = vmatprep.subr.mxu0 0.0
    %217 = vmatpush1.msra.mxu0 0.0
    %218 = vmatprep.subr.mxu0 0.0
    %219 = vmatpush1.msra.mxu0 0.0
    %220 = vmatprep.subr.mxu0 0.0
    %221 = vmatpush1.msra.mxu0 0.0
    %222 = vmatprep.subr.mxu0 0.0
    %223 = vmatpush1.msra.mxu0 0.0
    %224 = vmatprep.subr.mxu0 0.0
    %225 = vmatpush1.msra.mxu0 0.0
    %226 = vmatprep.subr.mxu0 0.0
    %227 = vmatpush1.msra.mxu0 0.0
    %228 = vmatprep.subr.mxu0 0.0
    %229 = vmatpush1.msra.mxu0 0.0
    %230 = vmatprep.subr.mxu0 0.0
    %231 = vmatpush1.msra.mxu0 0.0
    %232 = vmatprep.subr.mxu0 0.0
    %233 = vmatpush1.msra.mxu0 0.0
    %234 = vmatprep.subr.mxu0 0.0
    %235 = vmatpush1.msra.mxu0 0.0
    %236 = vmatprep.subr.mxu0 0.0
    %237 = vmatpush1.msra.mxu0 0.0
    %238 = vmatprep.subr.mxu0 0.0
    %239 = vmatpush1.msra.mxu0 0.0
    %240 = vmatprep.subr.mxu0 0.0
    %241 = vmatpush1.msra.mxu0 0.0
    %242 = vmatprep.subr.mxu0 0.0
    %243 = vmatpush1.msra.mxu0 0.0
    %244 = vmatprep.subr.mxu0 0.0
    %245 = vmatpush1.msra.mxu0 0.0
    %246 = vmatprep.subr.mxu0 0.0
    %247 = vmatpush1.msra.mxu0 0.0
    %248 = vmatprep.subr.mxu0 0.0
    %249 = vmatpush1.msra.mxu0 0.0
    %250 = vmatprep.subr.mxu0 0.0
    %251 = vmatpush1.msra.mxu0 0.0
    %252 = vmatprep.subr.mxu0 0.0
    %253 = vmatpush1.msra.mxu0 0.0
    %254 = vmatprep.subr.mxu0 0.0
    %255 = vmatpush1.msra.mxu0 0.0
    %256 = vmatprep.mubr.f32.mxu0 0.0
    %257 = vmatmul.mubr.f32.gmra.mrb[0].mxu0 %v178
    %v258 = vpop.f32.mrb[0].mxu0
    %v259 = vadd.f32 %v174, %v258
    %v260 = vpop.f32.mrb[0].mxu0
    %261 = vmatprep.mubr.f32.mxu0 0.0
    %262 = vmatmul.mubr.f32.gmra.mrb[0].mxu0 %v181
    %v263 = vpop.f32.mrb[0].mxu0
    %v264 = vadd.f32 %v174, %v263
    %v265 = vpop.f32.mrb[0].mxu0
    %266 = vmatprep.mubr.f32.mxu0 0.0
    %267 = vmatmul.mubr.f32.gmra.mrb[0].mxu0 %v184
    %v268 = vpop.f32.mrb[0].mxu0
    %v269 = vadd.f32 %v174, %v268
    %v270 = vpop.f32.mrb[0].mxu0
    %271 = vmatprep.mubr.f32.mxu0 0.0
    %272 = vmatmul.mubr.f32.gmra.mrb[0].mxu0 %v187
    %v273 = vpop.f32.mrb[0].mxu0
    %v274 = vadd.f32 %v174, %v273
    %v275 = vpop.f32.mrb[0].mxu0
    %276 = vmatprep.mubr.f32.mxu0 0.0
    %277 = vmatmul.mubr.f32.gmra.mrb[0].mxu0 %v190
    %v278 = vpop.f32.mrb[0].mxu0
    %v279 = vadd.f32 %v174, %v278
    %v280 = vpop.f32.mrb[0].mxu0
    %281 = vdwg.mxu0
    %v282 = vld [vmem:[%s5] sm:$0xff]
    %v283 = vld [vmem:[%s5 + $0x8] sm:$0xff]
    %v284 = vld [vmem:[%s5 + $0x10] sm:$0xff]
    %v285 = vld [vmem:[%s5 + $0x18] sm:$0xff]
    %v286 = vlaneseq
    %v287 = vand.u32 %v286, 127
    %vm288 = vcmp.ge.s32.totalorder %v287, 64
    %vm289 = vcmp.lt.s32.totalorder %v287, 96
    %vm290 = vmand %vm288, %vm289
    %v291 = vsel %vm290, 1.0, 0.5
    %v292 = vsel %vm290, 0.0, 0.5
    %v294 = vsel %vm88, %v159, 0
    %296 = vmatprep.subr.mxu0 0.0
    %297 = vmatpush1.msra.mxu0 %v282
    %298 = vmatprep.subr.mxu0 0.0
    %299 = vmatpush1.msra.mxu0 %v283
    %300 = vmatprep.subr.mxu0 0.0
    %301 = vmatpush1.msra.mxu0 %v284
    %302 = vmatprep.subr.mxu0 0.0
    %303 = vmatpush1.msra.mxu0 %v285
    %304 = vmatprep.subr.mxu0 0.0
    %305 = vmatpush1.msra.mxu0 0.0
    %306 = vmatprep.subr.mxu0 0.0
    %307 = vmatpush1.msra.mxu0 0.0
    %308 = vmatprep.subr.mxu0 0.0
    %309 = vmatpush1.msra.mxu0 0.0
    %310 = vmatprep.subr.mxu0 0.0
    %311 = vmatpush1.msra.mxu0 0.0
    %312 = vmatprep.subr.mxu0 0.0
    %313 = vmatpush1.msra.mxu0 0.0
    %314 = vmatprep.subr.mxu0 0.0
    %315 = vmatpush1.msra.mxu0 0.0
    %316 = vmatprep.subr.mxu0 0.0
    %317 = vmatpush1.msra.mxu0 0.0
    %318 = vmatprep.subr.mxu0 0.0
    %319 = vmatpush1.msra.mxu0 0.0
    %320 = vmatprep.subr.mxu0 0.0
    %321 = vmatpush1.msra.mxu0 0.0
    %322 = vmatprep.subr.mxu0 0.0
    %323 = vmatpush1.msra.mxu0 0.0
    %324 = vmatprep.subr.mxu0 0.0
    %325 = vmatpush1.msra.mxu0 0.0
    %326 = vmatprep.subr.mxu0 0.0
    %327 = vmatpush1.msra.mxu0 0.0
    %328 = vmatprep.subr.mxu0 0.0
    %329 = vmatpush1.msra.mxu0 0.0
    %330 = vmatprep.subr.mxu0 0.0
    %331 = vmatpush1.msra.mxu0 0.0
    %332 = vmatprep.subr.mxu0 0.0
    %333 = vmatpush1.msra.mxu0 0.0
    %334 = vmatprep.subr.mxu0 0.0
    %335 = vmatpush1.msra.mxu0 0.0
    %336 = vmatprep.subr.mxu0 0.0
    %337 = vmatpush1.msra.mxu0 0.0
    %338 = vmatprep.subr.mxu0 0.0
    %339 = vmatpush1.msra.mxu0 0.0
    %340 = vmatprep.subr.mxu0 0.0
    %341 = vmatpush1.msra.mxu0 0.0
    %342 = vmatprep.subr.mxu0 0.0
    %343 = vmatpush1.msra.mxu0 0.0
    %344 = vmatprep.subr.mxu0 0.0
    %345 = vmatpush1.msra.mxu0 0.0
    %346 = vmatprep.subr.mxu0 0.0
    %347 = vmatpush1.msra.mxu0 0.0
    %348 = vmatprep.subr.mxu0 0.0
    %349 = vmatpush1.msra.mxu0 0.0
    %350 = vmatprep.subr.mxu0 0.0
    %351 = vmatpush1.msra.mxu0 0.0
    %352 = vmatprep.subr.mxu0 0.0
    %353 = vmatpush1.msra.mxu0 0.0
    %354 = vmatprep.subr.mxu0 0.0
    %355 = vmatpush1.msra.mxu0 0.0
    %356 = vmatprep.subr.mxu0 0.0
    %357 = vmatpush1.msra.mxu0 0.0
    %358 = vmatprep.subr.mxu0 0.0
    %359 = vmatpush1.msra.mxu0 0.0
    %360 = vmatprep.mubr.f32.mxu0 0.0
    %361 = vmatmul.mubr.f32.gmra.mrb[0].mxu0 %v294
    %v362 = vpop.f32.mrb[0].mxu0
    %v363 = vadd.f32 0.0, %v362
    %v364 = vpop.f32.mrb[0].mxu0
    %365 = vdwg.mxu0
    %v366 = vadd.f32 %v259, %v363
    %v367 = vmul.f32 %v366, %v291
    %v368 = vtanh.pop %v367
    %v369 = vmul.f32 %v368, %v291
    %v370 = vadd.f32 %v369, %v292
    %v371 = vmul.f32 %v370, 0.0
    %373 = vrot.lane.b32.xlu0 %v370, 64
    %v374 = vpop.permute.xlu0 %373
    %v376 = vmul.f32 %v370, %v374
    %378 = vrot.lane.b32.xlu0 %v376, 32
    %v379 = vpop.permute.xlu0 %378
    %v381 = vadd.f32 %v371, %v379
    %v382 = vtanh.pop %v381
    %384 = vrot.lane.b32.xlu0 %v382, 64
    %v385 = vpop.permute.xlu0 %384
    %v387 = vmul.f32 %v370, %v385
    %389 = vrot.lane.b32.xlu0 %v387, 32
    %v390 = vpop.permute.xlu0 %389
    %vm392 = vcmask 257024
    %393 = vst.msk [vmem:[#allocation2] sm:$0xf] %vm392, %v390
    %v394 = vsel %vm88, %v390, 0
    %396 = vmatprep.subr.mxu0 0.0
    %397 = vmatpush1.msra.mxu0 %v282
    %398 = vmatprep.subr.mxu0 0.0
    %399 = vmatpush1.msra.mxu0 %v283
    %400 = vmatprep.subr.mxu0 0.0
    %401 = vmatpush1.msra.mxu0 %v284
    %402 = vmatprep.subr.mxu0 0.0
    %403 = vmatpush1.msra.mxu0 %v285
    %404 = vmatprep.subr.mxu0 0.0
    %405 = vmatpush1.msra.mxu0 0.0
    %406 = vmatprep.subr.mxu0 0.0
    %407 = vmatpush1.msra.mxu0 0.0
    %408 = vmatprep.subr.mxu0 0.0
    %409 = vmatpush1.msra.mxu0 0.0
    %410 = vmatprep.subr.mxu0 0.0
    %411 = vmatpush1.msra.mxu0 0.0
    %412 = vmatprep.subr.mxu0 0.0
    %413 = vmatpush1.msra.mxu0 0.0
    %414 = vmatprep.subr.mxu0 0.0
    %415 = vmatpush1.msra.mxu0 0.0
    %416 = vmatprep.subr.mxu0 0.0
    %417 = vmatpush1.msra.mxu0 0.0
    %418 = vmatprep.subr.mxu0 0.0
    %419 = vmatpush1.msra.mxu0 0.0
    %420 = vmatprep.subr.mxu0 0.0
    %421 = vmatpush1.msra.mxu0 0.0
    %422 = vmatprep.subr.mxu0 0.0
    %423 = vmatpush1.msra.mxu0 0.0
    %424 = vmatprep.subr.mxu0 0.0
    %425 = vmatpush1.msra.mxu0 0.0
    %426 = vmatprep.subr.mxu0 0.0
    %427 = vmatpush1.msra.mxu0 0.0
    %428 = vmatprep.subr.mxu0 0.0
    %429 = vmatpush1.msra.mxu0 0.0
    %430 = vmatprep.subr.mxu0 0.0
    %431 = vmatpush1.msra.mxu0 0.0
    %432 = vmatprep.subr.mxu0 0.0
    %433 = vmatpush1.msra.mxu0 0.0
    %434 = vmatprep.subr.mxu0 0.0
    %435 = vmatpush1.msra.mxu0 0.0
    %436 = vmatprep.subr.mxu0 0.0
    %437 = vmatpush1.msra.mxu0 0.0
    %438 = vmatprep.subr.mxu0 0.0
    %439 = vmatpush1.msra.mxu0 0.0
    %440 = vmatprep.subr.mxu0 0.0
    %441 = vmatpush1.msra.mxu0 0.0
    %442 = vmatprep.subr.mxu0 0.0
    %443 = vmatpush1.msra.mxu0 0.0
    %444 = vmatprep.subr.mxu0 0.0
    %445 = vmatpush1.msra.mxu0 0.0
    %446 = vmatprep.subr.mxu0 0.0
    %447 = vmatpush1.msra.mxu0 0.0
    %448 = vmatprep.subr.mxu0 0.0
    %449 = vmatpush1.msra.mxu0 0.0
    %450 = vmatprep.subr.mxu0 0.0
    %451 = vmatpush1.msra.mxu0 0.0
    %452 = vmatprep.subr.mxu0 0.0
    %453 = vmatpush1.msra.mxu0 0.0
    %454 = vmatprep.subr.mxu0 0.0
    %455 = vmatpush1.msra.mxu0 0.0
    %456 = vmatprep.subr.mxu0 0.0
    %457 = vmatpush1.msra.mxu0 0.0
    %458 = vmatprep.subr.mxu0 0.0
    %459 = vmatpush1.msra.mxu0 0.0
    %460 = vmatprep.mubr.f32.mxu0 0.0
    %461 = vmatmul.mubr.f32.gmra.mrb[0].mxu0 %v394
    %v462 = vpop.f32.mrb[0].mxu0
    %v463 = vadd.f32 0.0, %v462
    %v464 = vpop.f32.mrb[0].mxu0
    %465 = vdwg.mxu0
    %v467 = vrot.slane %v463, 4
    %v469 = vadd.f32 %v259, %v467
    %v470 = vmul.f32 %v469, %v291
    %v471 = vtanh.pop %v470
    %v472 = vmul.f32 %v471, %v291
    %v473 = vadd.f32 %v472, %v292
    %v475 = vrot.slane %v381, 4
    %v477 = vmul.f32 %v473, %v475
    %479 = vrot.lane.b32.xlu0 %v473, 64
    %v480 = vpop.permute.xlu0 %479
    %v482 = vmul.f32 %v473, %v480
    %484 = vrot.lane.b32.xlu0 %v482, 32
    %v485 = vpop.permute.xlu0 %484
    %v487 = vadd.f32 %v477, %v485
    %v488 = vtanh.pop %v487
    %490 = vrot.lane.b32.xlu0 %v488, 64
    %v491 = vpop.permute.xlu0 %490
    %v493 = vmul.f32 %v473, %v491
    %495 = vrot.lane.b32.xlu0 %v493, 32
    %v496 = vpop.permute.xlu0 %495
    %vm498 = vcmask 261124
    %499 = vst.msk [vmem:[#allocation2] sm:$0xf0] %vm498, %v496
    %v500 = vrot.slane %v493, 4
    %501 = vrot.lane.b32.xlu0 %v500, 32
    %v502 = vpop.permute.xlu0 %501
    %v503 = vsel %vm88, %v502, 0
    %505 = vmatprep.subr.mxu0 0.0
    %506 = vmatpush1.msra.mxu0 %v282
    %507 = vmatprep.subr.mxu0 0.0
    %508 = vmatpush1.msra.mxu0 %v283
    %509 = vmatprep.subr.mxu0 0.0
    %510 = vmatpush1.msra.mxu0 %v284
    %511 = vmatprep.subr.mxu0 0.0
    %512 = vmatpush1.msra.mxu0 %v285
    %513 = vmatprep.subr.mxu0 0.0
    %514 = vmatpush1.msra.mxu0 0.0
    %515 = vmatprep.subr.mxu0 0.0
    %516 = vmatpush1.msra.mxu0 0.0
    %517 = vmatprep.subr.mxu0 0.0
    %518 = vmatpush1.msra.mxu0 0.0
    %519 = vmatprep.subr.mxu0 0.0
    %520 = vmatpush1.msra.mxu0 0.0
    %521 = vmatprep.subr.mxu0 0.0
    %522 = vmatpush1.msra.mxu0 0.0
    %523 = vmatprep.subr.mxu0 0.0
    %524 = vmatpush1.msra.mxu0 0.0
    %525 = vmatprep.subr.mxu0 0.0
    %526 = vmatpush1.msra.mxu0 0.0
    %527 = vmatprep.subr.mxu0 0.0
    %528 = vmatpush1.msra.mxu0 0.0
    %529 = vmatprep.subr.mxu0 0.0
    %530 = vmatpush1.msra.mxu0 0.0
    %531 = vmatprep.subr.mxu0 0.0
    %532 = vmatpush1.msra.mxu0 0.0
    %533 = vmatprep.subr.mxu0 0.0
    %534 = vmatpush1.msra.mxu0 0.0
    %535 = vmatprep.subr.mxu0 0.0
    %536 = vmatpush1.msra.mxu0 0.0
    %537 = vmatprep.subr.mxu0 0.0
    %538 = vmatpush1.msra.mxu0 0.0
    %539 = vmatprep.subr.mxu0 0.0
    %540 = vmatpush1.msra.mxu0 0.0
    %541 = vmatprep.subr.mxu0 0.0
    %542 = vmatpush1.msra.mxu0 0.0
    %543 = vmatprep.subr.mxu0 0.0
    %544 = vmatpush1.msra.mxu0 0.0
    %545 = vmatprep.subr.mxu0 0.0
    %546 = vmatpush1.msra.mxu0 0.0
    %547 = vmatprep.subr.mxu0 0.0
    %548 = vmatpush1.msra.mxu0 0.0
    %549 = vmatprep.subr.mxu0 0.0
    %550 = vmatpush1.msra.mxu0 0.0
    %551 = vmatprep.subr.mxu0 0.0
    %552 = vmatpush1.msra.mxu0 0.0
    %553 = vmatprep.subr.mxu0 0.0
    %554 = vmatpush1.msra.mxu0 0.0
    %555 = vmatprep.subr.mxu0 0.0
    %556 = vmatpush1.msra.mxu0 0.0
    %557 = vmatprep.subr.mxu0 0.0
    %558 = vmatpush1.msra.mxu0 0.0
    %559 = vmatprep.subr.mxu0 0.0
    %560 = vmatpush1.msra.mxu0 0.0
    %561 = vmatprep.subr.mxu0 0.0
    %562 = vmatpush1.msra.mxu0 0.0
    %563 = vmatprep.subr.mxu0 0.0
    %564 = vmatpush1.msra.mxu0 0.0
    %565 = vmatprep.subr.mxu0 0.0
    %566 = vmatpush1.msra.mxu0 0.0
    %567 = vmatprep.subr.mxu0 0.0
    %568 = vmatpush1.msra.mxu0 0.0
    %569 = vmatprep.mubr.f32.mxu0 0.0
    %570 = vmatmul.mubr.f32.gmra.mrb[0].mxu0 %v503
    %v571 = vpop.f32.mrb[0].mxu0
    %v572 = vadd.f32 0.0, %v571
    %v573 = vpop.f32.mrb[0].mxu0
    %574 = vdwg.mxu0
    %v575 = vadd.f32 %v264, %v572
    %v576 = vmul.f32 %v575, %v291
    %v577 = vtanh.pop %v576
    %v578 = vmul.f32 %v577, %v291
    %v579 = vadd.f32 %v578, %v292
    %v581 = vrot.slane %v487, 4
    %v583 = vmul.f32 %v579, %v581
    %585 = vrot.lane.b32.xlu0 %v579, 64
    %v586 = vpop.permute.xlu0 %585
    %v588 = vmul.f32 %v579, %v586
    %590 = vrot.lane.b32.xlu0 %v588, 32
    %v591 = vpop.permute.xlu0 %590
    %v593 = vadd.f32 %v583, %v591
    %v594 = vtanh.pop %v593
    %596 = vrot.lane.b32.xlu0 %v594, 64
    %v597 = vpop.permute.xlu0 %596
    %v599 = vmul.f32 %v579, %v597
    %601 = vrot.lane.b32.xlu0 %v599, 32
    %v602 = vpop.permute.xlu0 %601
    %604 = vst.msk [vmem:[#allocation2 + $0x8] sm:$0xf] %vm392, %v602
    %v605 = vsel %vm88, %v602, 0
    %607 = vmatprep.subr.mxu0 0.0
    %608 = vmatpush1.msra.mxu0 %v282
    %609 = vmatprep.subr.mxu0 0.0
    %610 = vmatpush1.msra.mxu0 %v283
    %611 = vmatprep.subr.mxu0 0.0
    %612 = vmatpush1.msra.mxu0 %v284
    %613 = vmatprep.subr.mxu0 0.0
    %614 = vmatpush1.msra.mxu0 %v285
    %615 = vmatprep.subr.mxu0 0.0
    %616 = vmatpush1.msra.mxu0 0.0
    %617 = vmatprep.subr.mxu0 0.0
    %618 = vmatpush1.msra.mxu0 0.0
    %619 = vmatprep.subr.mxu0 0.0
    %620 = vmatpush1.msra.mxu0 0.0
    %621 = vmatprep.subr.mxu0 0.0
    %622 = vmatpush1.msra.mxu0 0.0
    %623 = vmatprep.subr.mxu0 0.0
    %624 = vmatpush1.msra.mxu0 0.0
    %625 = vmatprep.subr.mxu0 0.0
    %626 = vmatpush1.msra.mxu0 0.0
    %627 = vmatprep.subr.mxu0 0.0
    %628 = vmatpush1.msra.mxu0 0.0
    %629 = vmatprep.subr.mxu0 0.0
    %630 = vmatpush1.msra.mxu0 0.0
    %631 = vmatprep.subr.mxu0 0.0
    %632 = vmatpush1.msra.mxu0 0.0
    %633 = vmatprep.subr.mxu0 0.0
    %634 = vmatpush1.msra.mxu0 0.0
    %635 = vmatprep.subr.mxu0 0.0
    %636 = vmatpush1.msra.mxu0 0.0
    %637 = vmatprep.subr.mxu0 0.0
    %638 = vmatpush1.msra.mxu0 0.0
    %639 = vmatprep.subr.mxu0 0.0
    %640 = vmatpush1.msra.mxu0 0.0
    %641 = vmatprep.subr.mxu0 0.0
    %642 = vmatpush1.msra.mxu0 0.0
    %643 = vmatprep.subr.mxu0 0.0
    %644 = vmatpush1.msra.mxu0 0.0
    %645 = vmatprep.subr.mxu0 0.0
    %646 = vmatpush1.msra.mxu0 0.0
    %647 = vmatprep.subr.mxu0 0.0
    %648 = vmatpush1.msra.mxu0 0.0
    %649 = vmatprep.subr.mxu0 0.0
    %650 = vmatpush1.msra.mxu0 0.0
    %651 = vmatprep.subr.mxu0 0.0
    %652 = vmatpush1.msra.mxu0 0.0
    %653 = vmatprep.subr.mxu0 0.0
    %654 = vmatpush1.msra.mxu0 0.0
    %655 = vmatprep.subr.mxu0 0.0
    %656 = vmatpush1.msra.mxu0 0.0
    %657 = vmatprep.subr.mxu0 0.0
    %658 = vmatpush1.msra.mxu0 0.0
    %659 = vmatprep.subr.mxu0 0.0
    %660 = vmatpush1.msra.mxu0 0.0
    %661 = vmatprep.subr.mxu0 0.0
    %662 = vmatpush1.msra.mxu0 0.0
    %663 = vmatprep.subr.mxu0 0.0
    %664 = vmatpush1.msra.mxu0 0.0
    %665 = vmatprep.subr.mxu0 0.0
    %666 = vmatpush1.msra.mxu0 0.0
    %667 = vmatprep.subr.mxu0 0.0
    %668 = vmatpush1.msra.mxu0 0.0
    %669 = vmatprep.subr.mxu0 0.0
    %670 = vmatpush1.msra.mxu0 0.0
    %671 = vmatprep.mubr.f32.mxu0 0.0
    %672 = vmatmul.mubr.f32.gmra.mrb[0].mxu0 %v605
    %v673 = vpop.f32.mrb[0].mxu0
    %v674 = vadd.f32 0.0, %v673
    %v675 = vpop.f32.mrb[0].mxu0
    %676 = vdwg.mxu0
    %v678 = vrot.slane %v674, 4
    %v680 = vadd.f32 %v264, %v678
    %v681 = vmul.f32 %v680, %v291
    %v682 = vtanh.pop %v681
    %v683 = vmul.f32 %v682, %v291
    %v684 = vadd.f32 %v683, %v292
    %v686 = vrot.slane %v593, 4
    %v688 = vmul.f32 %v684, %v686
    %690 = vrot.lane.b32.xlu0 %v684, 64
    %v691 = vpop.permute.xlu0 %690
    %v693 = vmul.f32 %v684, %v691
    %695 = vrot.lane.b32.xlu0 %v693, 32
    %v696 = vpop.permute.xlu0 %695
    %v698 = vadd.f32 %v688, %v696
    %v699 = vtanh.pop %v698
    %701 = vrot.lane.b32.xlu0 %v699, 64
    %v702 = vpop.permute.xlu0 %701
    %v704 = vmul.f32 %v684, %v702
    %706 = vrot.lane.b32.xlu0 %v704, 32
    %v707 = vpop.permute.xlu0 %706
    %709 = vst.msk [vmem:[#allocation2 + $0x8] sm:$0xf0] %vm498, %v707
    %v710 = vrot.slane %v704, 4
    %711 = vrot.lane.b32.xlu0 %v710, 32
    %v712 = vpop.permute.xlu0 %711
    %v713 = vsel %vm88, %v712, 0
    %715 = vmatprep.subr.mxu0 0.0
    %716 = vmatpush1.msra.mxu0 %v282
    %717 = vmatprep.subr.mxu0 0.0
    %718 = vmatpush1.msra.mxu0 %v283
    %719 = vmatprep.subr.mxu0 0.0
    %720 = vmatpush1.msra.mxu0 %v284
    %721 = vmatprep.subr.mxu0 0.0
    %722 = vmatpush1.msra.mxu0 %v285
    %723 = vmatprep.subr.mxu0 0.0
    %724 = vmatpush1.msra.mxu0 0.0
    %725 = vmatprep.subr.mxu0 0.0
    %726 = vmatpush1.msra.mxu0 0.0
    %727 = vmatprep.subr.mxu0 0.0
    %728 = vmatpush1.msra.mxu0 0.0
    %729 = vmatprep.subr.mxu0 0.0
    %730 = vmatpush1.msra.mxu0 0.0
    %731 = vmatprep.subr.mxu0 0.0
    %732 = vmatpush1.msra.mxu0 0.0
    %733 = vmatprep.subr.mxu0 0.0
    %734 = vmatpush1.msra.mxu0 0.0
    %735 = vmatprep.subr.mxu0 0.0
    %736 = vmatpush1.msra.mxu0 0.0
    %737 = vmatprep.subr.mxu0 0.0
    %738 = vmatpush1.msra.mxu0 0.0
    %739 = vmatprep.subr.mxu0 0.0
    %740 = vmatpush1.msra.mxu0 0.0
    %741 = vmatprep.subr.mxu0 0.0
    %742 = vmatpush1.msra.mxu0 0.0
    %743 = vmatprep.subr.mxu0 0.0
    %744 = vmatpush1.msra.mxu0 0.0
    %745 = vmatprep.subr.mxu0 0.0
    %746 = vmatpush1.msra.mxu0 0.0
    %747 = vmatprep.subr.mxu0 0.0
    %748 = vmatpush1.msra.mxu0 0.0
    %749 = vmatprep.subr.mxu0 0.0
    %750 = vmatpush1.msra.mxu0 0.0
    %751 = vmatprep.subr.mxu0 0.0
    %752 = vmatpush1.msra.mxu0 0.0
    %753 = vmatprep.subr.mxu0 0.0
    %754 = vmatpush1.msra.mxu0 0.0
    %755 = vmatprep.subr.mxu0 0.0
    %756 = vmatpush1.msra.mxu0 0.0
    %757 = vmatprep.subr.mxu0 0.0
    %758 = vmatpush1.msra.mxu0 0.0
    %759 = vmatprep.subr.mxu0 0.0
    %760 = vmatpush1.msra.mxu0 0.0
    %761 = vmatprep.subr.mxu0 0.0
    %762 = vmatpush1.msra.mxu0 0.0
    %763 = vmatprep.subr.mxu0 0.0
    %764 = vmatpush1.msra.mxu0 0.0
    %765 = vmatprep.subr.mxu0 0.0
    %766 = vmatpush1.msra.mxu0 0.0
    %767 = vmatprep.subr.mxu0 0.0
    %768 = vmatpush1.msra.mxu0 0.0
    %769 = vmatprep.subr.mxu0 0.0
    %770 = vmatpush1.msra.mxu0 0.0
    %771 = vmatprep.subr.mxu0 0.0
    %772 = vmatpush1.msra.mxu0 0.0
    %773 = vmatprep.subr.mxu0 0.0
    %774 = vmatpush1.msra.mxu0 0.0
    %775 = vmatprep.subr.mxu0 0.0
    %776 = vmatpush1.msra.mxu0 0.0
    %777 = vmatprep.subr.mxu0 0.0
    %778 = vmatpush1.msra.mxu0 0.0
    %779 = vmatprep.mubr.f32.mxu0 0.0
    %780 = vmatmul.mubr.f32.gmra.mrb[0].mxu0 %v713
    %v781 = vpop.f32.mrb[0].mxu0
    %v782 = vadd.f32 0.0, %v781
    %v783 = vpop.f32.mrb[0].mxu0
    %784 = vdwg.mxu0
    %v785 = vadd.f32 %v269, %v782
    %v786 = vmul.f32 %v785, %v291
    %v787 = vtanh.pop %v786
    %v788 = vmul.f32 %v787, %v291
    %v789 = vadd.f32 %v788, %v292
    %v791 = vrot.slane %v698, 4
    %v793 = vmul.f32 %v789, %v791
    %795 = vrot.lane.b32.xlu0 %v789, 64
    %v796 = vpop.permute.xlu0 %795
    %v798 = vmul.f32 %v789, %v796
    %800 = vrot.lane.b32.xlu0 %v798, 32
    %v801 = vpop.permute.xlu0 %800
    %v803 = vadd.f32 %v793, %v801
    %v804 = vtanh.pop %v803
    %806 = vrot.lane.b32.xlu0 %v804, 64
    %v807 = vpop.permute.xlu0 %806
    %v809 = vmul.f32 %v789, %v807
    %811 = vrot.lane.b32.xlu0 %v809, 32
    %v812 = vpop.permute.xlu0 %811
    %814 = vst.msk [vmem:[#allocation2 + $0x10] sm:$0xf] %vm392, %v812
    %v815 = vsel %vm88, %v812, 0
    %817 = vmatprep.subr.mxu0 0.0
    %818 = vmatpush1.msra.mxu0 %v282
    %819 = vmatprep.subr.mxu0 0.0
    %820 = vmatpush1.msra.mxu0 %v283
    %821 = vmatprep.subr.mxu0 0.0
    %822 = vmatpush1.msra.mxu0 %v284
    %823 = vmatprep.subr.mxu0 0.0
    %824 = vmatpush1.msra.mxu0 %v285
    %825 = vmatprep.subr.mxu0 0.0
    %826 = vmatpush1.msra.mxu0 0.0
    %827 = vmatprep.subr.mxu0 0.0
    %828 = vmatpush1.msra.mxu0 0.0
    %829 = vmatprep.subr.mxu0 0.0
    %830 = vmatpush1.msra.mxu0 0.0
    %831 = vmatprep.subr.mxu0 0.0
    %832 = vmatpush1.msra.mxu0 0.0
    %833 = vmatprep.subr.mxu0 0.0
    %834 = vmatpush1.msra.mxu0 0.0
    %835 = vmatprep.subr.mxu0 0.0
    %836 = vmatpush1.msra.mxu0 0.0
    %837 = vmatprep.subr.mxu0 0.0
    %838 = vmatpush1.msra.mxu0 0.0
    %839 = vmatprep.subr.mxu0 0.0
    %840 = vmatpush1.msra.mxu0 0.0
    %841 = vmatprep.subr.mxu0 0.0
    %842 = vmatpush1.msra.mxu0 0.0
    %843 = vmatprep.subr.mxu0 0.0
    %844 = vmatpush1.msra.mxu0 0.0
    %845 = vmatprep.subr.mxu0 0.0
    %846 = vmatpush1.msra.mxu0 0.0
    %847 = vmatprep.subr.mxu0 0.0
    %848 = vmatpush1.msra.mxu0 0.0
    %849 = vmatprep.subr.mxu0 0.0
    %850 = vmatpush1.msra.mxu0 0.0
    %851 = vmatprep.subr.mxu0 0.0
    %852 = vmatpush1.msra.mxu0 0.0
    %853 = vmatprep.subr.mxu0 0.0
    %854 = vmatpush1.msra.mxu0 0.0
    %855 = vmatprep.subr.mxu0 0.0
    %856 = vmatpush1.msra.mxu0 0.0
    %857 = vmatprep.subr.mxu0 0.0
    %858 = vmatpush1.msra.mxu0 0.0
    %859 = vmatprep.subr.mxu0 0.0
    %860 = vmatpush1.msra.mxu0 0.0
    %861 = vmatprep.subr.mxu0 0.0
    %862 = vmatpush1.msra.mxu0 0.0
    %863 = vmatprep.subr.mxu0 0.0
    %864 = vmatpush1.msra.mxu0 0.0
    %865 = vmatprep.subr.mxu0 0.0
    %866 = vmatpush1.msra.mxu0 0.0
    %867 = vmatprep.subr.mxu0 0.0
    %868 = vmatpush1.msra.mxu0 0.0
    %869 = vmatprep.subr.mxu0 0.0
    %870 = vmatpush1.msra.mxu0 0.0
    %871 = vmatprep.subr.mxu0 0.0
    %872 = vmatpush1.msra.mxu0 0.0
    %873 = vmatprep.subr.mxu0 0.0
    %874 = vmatpush1.msra.mxu0 0.0
    %875 = vmatprep.subr.mxu0 0.0
    %876 = vmatpush1.msra.mxu0 0.0
    %877 = vmatprep.subr.mxu0 0.0
    %878 = vmatpush1.msra.mxu0 0.0
    %879 = vmatprep.subr.mxu0 0.0
    %880 = vmatpush1.msra.mxu0 0.0
    %881 = vmatprep.mubr.f32.mxu0 0.0
    %882 = vmatmul.mubr.f32.gmra.mrb[0].mxu0 %v815
    %v883 = vpop.f32.mrb[0].mxu0
    %v884 = vadd.f32 0.0, %v883
    %v885 = vpop.f32.mrb[0].mxu0
    %886 = vdwg.mxu0
    %v888 = vrot.slane %v884, 4
    %v890 = vadd.f32 %v269, %v888
    %v891 = vmul.f32 %v890, %v291
    %v892 = vtanh.pop %v891
    %v893 = vmul.f32 %v892, %v291
    %v894 = vadd.f32 %v893, %v292
    %v896 = vrot.slane %v803, 4
    %v898 = vmul.f32 %v894, %v896
    %900 = vrot.lane.b32.xlu0 %v894, 64
    %v901 = vpop.permute.xlu0 %900
    %v903 = vmul.f32 %v894, %v901
    %905 = vrot.lane.b32.xlu0 %v903, 32
    %v906 = vpop.permute.xlu0 %905
    %v908 = vadd.f32 %v898, %v906
    %v909 = vtanh.pop %v908
    %911 = vrot.lane.b32.xlu0 %v909, 64
    %v912 = vpop.permute.xlu0 %911
    %v914 = vmul.f32 %v894, %v912
    %916 = vrot.lane.b32.xlu0 %v914, 32
    %v917 = vpop.permute.xlu0 %916
    %919 = vst.msk [vmem:[#allocation2 + $0x10] sm:$0xf0] %vm498, %v917
    %v920 = vrot.slane %v914, 4
    %921 = vrot.lane.b32.xlu0 %v920, 32
    %v922 = vpop.permute.xlu0 %921
    %v923 = vsel %vm88, %v922, 0
    %925 = vmatprep.subr.mxu0 0.0
    %926 = vmatpush1.msra.mxu0 %v282
    %927 = vmatprep.subr.mxu0 0.0
    %928 = vmatpush1.msra.mxu0 %v283
    %929 = vmatprep.subr.mxu0 0.0
    %930 = vmatpush1.msra.mxu0 %v284
    %931 = vmatprep.subr.mxu0 0.0
    %932 = vmatpush1.msra.mxu0 %v285
    %933 = vmatprep.subr.mxu0 0.0
    %934 = vmatpush1.msra.mxu0 0.0
    %935 = vmatprep.subr.mxu0 0.0
    %936 = vmatpush1.msra.mxu0 0.0
    %937 = vmatprep.subr.mxu0 0.0
    %938 = vmatpush1.msra.mxu0 0.0
    %939 = vmatprep.subr.mxu0 0.0
    %940 = vmatpush1.msra.mxu0 0.0
    %941 = vmatprep.subr.mxu0 0.0
    %942 = vmatpush1.msra.mxu0 0.0
    %943 = vmatprep.subr.mxu0 0.0
    %944 = vmatpush1.msra.mxu0 0.0
    %945 = vmatprep.subr.mxu0 0.0
    %946 = vmatpush1.msra.mxu0 0.0
    %947 = vmatprep.subr.mxu0 0.0
    %948 = vmatpush1.msra.mxu0 0.0
    %949 = vmatprep.subr.mxu0 0.0
    %950 = vmatpush1.msra.mxu0 0.0
    %951 = vmatprep.subr.mxu0 0.0
    %952 = vmatpush1.msra.mxu0 0.0
    %953 = vmatprep.subr.mxu0 0.0
    %954 = vmatpush1.msra.mxu0 0.0
    %955 = vmatprep.subr.mxu0 0.0
    %956 = vmatpush1.msra.mxu0 0.0
    %957 = vmatprep.subr.mxu0 0.0
    %958 = vmatpush1.msra.mxu0 0.0
    %959 = vmatprep.subr.mxu0 0.0
    %960 = vmatpush1.msra.mxu0 0.0
    %961 = vmatprep.subr.mxu0 0.0
    %962 = vmatpush1.msra.mxu0 0.0
    %963 = vmatprep.subr.mxu0 0.0
    %964 = vmatpush1.msra.mxu0 0.0
    %965 = vmatprep.subr.mxu0 0.0
    %966 = vmatpush1.msra.mxu0 0.0
    %967 = vmatprep.subr.mxu0 0.0
    %968 = vmatpush1.msra.mxu0 0.0
    %969 = vmatprep.subr.mxu0 0.0
    %970 = vmatpush1.msra.mxu0 0.0
    %971 = vmatprep.subr.mxu0 0.0
    %972 = vmatpush1.msra.mxu0 0.0
    %973 = vmatprep.subr.mxu0 0.0
    %974 = vmatpush1.msra.mxu0 0.0
    %975 = vmatprep.subr.mxu0 0.0
    %976 = vmatpush1.msra.mxu0 0.0
    %977 = vmatprep.subr.mxu0 0.0
    %978 = vmatpush1.msra.mxu0 0.0
    %979 = vmatprep.subr.mxu0 0.0
    %980 = vmatpush1.msra.mxu0 0.0
    %981 = vmatprep.subr.mxu0 0.0
    %982 = vmatpush1.msra.mxu0 0.0
    %983 = vmatprep.subr.mxu0 0.0
    %984 = vmatpush1.msra.mxu0 0.0
    %985 = vmatprep.subr.mxu0 0.0
    %986 = vmatpush1.msra.mxu0 0.0
    %987 = vmatprep.subr.mxu0 0.0
    %988 = vmatpush1.msra.mxu0 0.0
    %989 = vmatprep.mubr.f32.mxu0 0.0
    %990 = vmatmul.mubr.f32.gmra.mrb[0].mxu0 %v923
    %v991 = vpop.f32.mrb[0].mxu0
    %v992 = vadd.f32 0.0, %v991
    %v993 = vpop.f32.mrb[0].mxu0
    %994 = vdwg.mxu0
    %v995 = vadd.f32 %v274, %v992
    %v996 = vmul.f32 %v995, %v291
    %v997 = vtanh.pop %v996
    %v998 = vmul.f32 %v997, %v291
    %v999 = vadd.f32 %v998, %v292
    %v1001 = vrot.slane %v908, 4
    %v1003 = vmul.f32 %v999, %v1001
    %1005 = vrot.lane.b32.xlu0 %v999, 64
    %v1006 = vpop.permute.xlu0 %1005
    %v1008 = vmul.f32 %v999, %v1006
    %1010 = vrot.lane.b32.xlu0 %v1008, 32
    %v1011 = vpop.permute.xlu0 %1010
    %v1013 = vadd.f32 %v1003, %v1011
    %v1014 = vtanh.pop %v1013
    %1016 = vrot.lane.b32.xlu0 %v1014, 64
    %v1017 = vpop.permute.xlu0 %1016
    %v1019 = vmul.f32 %v999, %v1017
    %1021 = vrot.lane.b32.xlu0 %v1019, 32
    %v1022 = vpop.permute.xlu0 %1021
    %1024 = vst.msk [vmem:[#allocation2 + $0x18] sm:$0xf] %vm392, %v1022
    %v1025 = vsel %vm88, %v1022, 0
    %1027 = vmatprep.subr.mxu0 0.0
    %1028 = vmatpush1.msra.mxu0 %v282
    %1029 = vmatprep.subr.mxu0 0.0
    %1030 = vmatpush1.msra.mxu0 %v283
    %1031 = vmatprep.subr.mxu0 0.0
    %1032 = vmatpush1.msra.mxu0 %v284
    %1033 = vmatprep.subr.mxu0 0.0
    %1034 = vmatpush1.msra.mxu0 %v285
    %1035 = vmatprep.subr.mxu0 0.0
    %1036 = vmatpush1.msra.mxu0 0.0
    %1037 = vmatprep.subr.mxu0 0.0
    %1038 = vmatpush1.msra.mxu0 0.0
    %1039 = vmatprep.subr.mxu0 0.0
    %1040 = vmatpush1.msra.mxu0 0.0
    %1041 = vmatprep.subr.mxu0 0.0
    %1042 = vmatpush1.msra.mxu0 0.0
    %1043 = vmatprep.subr.mxu0 0.0
    %1044 = vmatpush1.msra.mxu0 0.0
    %1045 = vmatprep.subr.mxu0 0.0
    %1046 = vmatpush1.msra.mxu0 0.0
    %1047 = vmatprep.subr.mxu0 0.0
    %1048 = vmatpush1.msra.mxu0 0.0
    %1049 = vmatprep.subr.mxu0 0.0
    %1050 = vmatpush1.msra.mxu0 0.0
    %1051 = vmatprep.subr.mxu0 0.0
    %1052 = vmatpush1.msra.mxu0 0.0
    %1053 = vmatprep.subr.mxu0 0.0
    %1054 = vmatpush1.msra.mxu0 0.0
    %1055 = vmatprep.subr.mxu0 0.0
    %1056 = vmatpush1.msra.mxu0 0.0
    %1057 = vmatprep.subr.mxu0 0.0
    %1058 = vmatpush1.msra.mxu0 0.0
    %1059 = vmatprep.subr.mxu0 0.0
    %1060 = vmatpush1.msra.mxu0 0.0
    %1061 = vmatprep.subr.mxu0 0.0
    %1062 = vmatpush1.msra.mxu0 0.0
    %1063 = vmatprep.subr.mxu0 0.0
    %1064 = vmatpush1.msra.mxu0 0.0
    %1065 = vmatprep.subr.mxu0 0.0
    %1066 = vmatpush1.msra.mxu0 0.0
    %1067 = vmatprep.subr.mxu0 0.0
    %1068 = vmatpush1.msra.mxu0 0.0
    %1069 = vmatprep.subr.mxu0 0.0
    %1070 = vmatpush1.msra.mxu0 0.0
    %1071 = vmatprep.subr.mxu0 0.0
    %1072 = vmatpush1.msra.mxu0 0.0
    %1073 = vmatprep.subr.mxu0 0.0
    %1074 = vmatpush1.msra.mxu0 0.0
    %1075 = vmatprep.subr.mxu0 0.0
    %1076 = vmatpush1.msra.mxu0 0.0
    %1077 = vmatprep.subr.mxu0 0.0
    %1078 = vmatpush1.msra.mxu0 0.0
    %1079 = vmatprep.subr.mxu0 0.0
    %1080 = vmatpush1.msra.mxu0 0.0
    %1081 = vmatprep.subr.mxu0 0.0
    %1082 = vmatpush1.msra.mxu0 0.0
    %1083 = vmatprep.subr.mxu0 0.0
    %1084 = vmatpush1.msra.mxu0 0.0
    %1085 = vmatprep.subr.mxu0 0.0
    %1086 = vmatpush1.msra.mxu0 0.0
    %1087 = vmatprep.subr.mxu0 0.0
    %1088 = vmatpush1.msra.mxu0 0.0
    %1089 = vmatprep.subr.mxu0 0.0
    %1090 = vmatpush1.msra.mxu0 0.0
    %1091 = vmatprep.mubr.f32.mxu0 0.0
    %1092 = vmatmul.mubr.f32.gmra.mrb[0].mxu0 %v1025
    %v1093 = vpop.f32.mrb[0].mxu0
    %v1094 = vadd.f32 0.0, %v1093
    %v1095 = vpop.f32.mrb[0].mxu0
    %1096 = vdwg.mxu0
    %v1098 = vrot.slane %v1094, 4
    %v1100 = vadd.f32 %v274, %v1098
    %v1101 = vmul.f32 %v1100, %v291
    %v1102 = vtanh.pop %v1101
    %v1103 = vmul.f32 %v1102, %v291
    %v1104 = vadd.f32 %v1103, %v292
    %v1106 = vrot.slane %v1013, 4
    %v1108 = vmul.f32 %v1104, %v1106
    %1110 = vrot.lane.b32.xlu0 %v1104, 64
    %v1111 = vpop.permute.xlu0 %1110
    %v1113 = vmul.f32 %v1104, %v1111
    %1115 = vrot.lane.b32.xlu0 %v1113, 32
    %v1116 = vpop.permute.xlu0 %1115
    %v1118 = vadd.f32 %v1108, %v1116
    %v1119 = vtanh.pop %v1118
    %1121 = vrot.lane.b32.xlu0 %v1119, 64
    %v1122 = vpop.permute.xlu0 %1121
    %v1124 = vmul.f32 %v1104, %v1122
    %1126 = vrot.lane.b32.xlu0 %v1124, 32
    %v1127 = vpop.permute.xlu0 %1126
    %1129 = vst.msk [vmem:[#allocation2 + $0x18] sm:$0xf0] %vm498, %v1127
    %v1130 = vrot.slane %v1124, 4
    %1131 = vrot.lane.b32.xlu0 %v1130, 32
    %v1132 = vpop.permute.xlu0 %1131
    %v1133 = vsel %vm88, %v1132, 0
    %1135 = vmatprep.subr.mxu0 0.0
    %1136 = vmatpush1.msra.mxu0 %v282
    %1137 = vmatprep.subr.mxu0 0.0
    %1138 = vmatpush1.msra.mxu0 %v283
    %1139 = vmatprep.subr.mxu0 0.0
    %1140 = vmatpush1.msra.mxu0 %v284
    %1141 = vmatprep.subr.mxu0 0.0
    %1142 = vmatpush1.msra.mxu0 %v285
    %1143 = vmatprep.subr.mxu0 0.0
    %1144 = vmatpush1.msra.mxu0 0.0
    %1145 = vmatprep.subr.mxu0 0.0
    %1146 = vmatpush1.msra.mxu0 0.0
    %1147 = vmatprep.subr.mxu0 0.0
    %1148 = vmatpush1.msra.mxu0 0.0
    %1149 = vmatprep.subr.mxu0 0.0
    %1150 = vmatpush1.msra.mxu0 0.0
    %1151 = vmatprep.subr.mxu0 0.0
    %1152 = vmatpush1.msra.mxu0 0.0
    %1153 = vmatprep.subr.mxu0 0.0
    %1154 = vmatpush1.msra.mxu0 0.0
    %1155 = vmatprep.subr.mxu0 0.0
    %1156 = vmatpush1.msra.mxu0 0.0
    %1157 = vmatprep.subr.mxu0 0.0
    %1158 = vmatpush1.msra.mxu0 0.0
    %1159 = vmatprep.subr.mxu0 0.0
    %1160 = vmatpush1.msra.mxu0 0.0
    %1161 = vmatprep.subr.mxu0 0.0
    %1162 = vmatpush1.msra.mxu0 0.0
    %1163 = vmatprep.subr.mxu0 0.0
    %1164 = vmatpush1.msra.mxu0 0.0
    %1165 = vmatprep.subr.mxu0 0.0
    %1166 = vmatpush1.msra.mxu0 0.0
    %1167 = vmatprep.subr.mxu0 0.0
    %1168 = vmatpush1.msra.mxu0 0.0
    %1169 = vmatprep.subr.mxu0 0.0
    %1170 = vmatpush1.msra.mxu0 0.0
    %1171 = vmatprep.subr.mxu0 0.0
    %1172 = vmatpush1.msra.mxu0 0.0
    %1173 = vmatprep.subr.mxu0 0.0
    %1174 = vmatpush1.msra.mxu0 0.0
    %1175 = vmatprep.subr.mxu0 0.0
    %1176 = vmatpush1.msra.mxu0 0.0
    %1177 = vmatprep.subr.mxu0 0.0
    %1178 = vmatpush1.msra.mxu0 0.0
    %1179 = vmatprep.subr.mxu0 0.0
    %1180 = vmatpush1.msra.mxu0 0.0
    %1181 = vmatprep.subr.mxu0 0.0
    %1182 = vmatpush1.msra.mxu0 0.0
    %1183 = vmatprep.subr.mxu0 0.0
    %1184 = vmatpush1.msra.mxu0 0.0
    %1185 = vmatprep.subr.mxu0 0.0
    %1186 = vmatpush1.msra.mxu0 0.0
    %1187 = vmatprep.subr.mxu0 0.0
    %1188 = vmatpush1.msra.mxu0 0.0
    %1189 = vmatprep.subr.mxu0 0.0
    %1190 = vmatpush1.msra.mxu0 0.0
    %1191 = vmatprep.subr.mxu0 0.0
    %1192 = vmatpush1.msra.mxu0 0.0
    %1193 = vmatprep.subr.mxu0 0.0
    %1194 = vmatpush1.msra.mxu0 0.0
    %1195 = vmatprep.subr.mxu0 0.0
    %1196 = vmatpush1.msra.mxu0 0.0
    %1197 = vmatprep.subr.mxu0 0.0
    %1198 = vmatpush1.msra.mxu0 0.0
    %1199 = vmatprep.mubr.f32.mxu0 0.0
    %1200 = vmatmul.mubr.f32.gmra.mrb[0].mxu0 %v1133
    %v1201 = vpop.f32.mrb[0].mxu0
    %v1202 = vadd.f32 0.0, %v1201
    %v1203 = vpop.f32.mrb[0].mxu0
    %1204 = vdwg.mxu0
    %v1205 = vadd.f32 %v279, %v1202
    %v1206 = vmul.f32 %v1205, %v291
    %v1207 = vtanh.pop %v1206
    %v1208 = vmul.f32 %v1207, %v291
    %v1209 = vadd.f32 %v1208, %v292
    %v1211 = vrot.slane %v1118, 4
    %v1213 = vmul.f32 %v1209, %v1211
    %1215 = vrot.lane.b32.xlu0 %v1209, 64
    %v1216 = vpop.permute.xlu0 %1215
    %v1218 = vmul.f32 %v1209, %v1216
    %1220 = vrot.lane.b32.xlu0 %v1218, 32
    %v1221 = vpop.permute.xlu0 %1220
    %v1223 = vadd.f32 %v1213, %v1221
    %v1224 = vtanh.pop %v1223
    %1226 = vrot.lane.b32.xlu0 %v1224, 64
    %v1227 = vpop.permute.xlu0 %1226
    %v1229 = vmul.f32 %v1209, %v1227
    %1231 = vrot.lane.b32.xlu0 %v1229, 32
    %v1232 = vpop.permute.xlu0 %1231
    %1234 = vst.msk [vmem:[#allocation2 + $0x20] sm:$0xf] %vm392, %v1232
    %v1235 = vld [vmem:[#allocation2] sm:$0xff]
    %v1236 = vld [vmem:[#allocation2 + $0x8] sm:$0xff]
    %v1237 = vld [vmem:[#allocation2 + $0x10] sm:$0xff]
    %v1238 = vld [vmem:[#allocation2 + $0x18] sm:$0xff]
    %v1239 = vld [vmem:[#allocation2 + $0x20] sm:$0xf]
    %v1240 = vld [vmem:[#allocation8] sm:$0xff]
    %v1241 = vld [vmem:[#allocation8 + $0x8] sm:$0xff]
    %v1242 = vld [vmem:[#allocation8 + $0x10] sm:$0xff]
    %v1243 = vld [vmem:[#allocation8 + $0x18] sm:$0xff]
    %v1244 = vld [vmem:[%s8] sm:$0x1]
    %v1246 = vlaneseq
    %v1247 = vshrl.u32 %v1246, 7
    %v1248 = vsub.s32 0, %v1247
    %v1249 = vrot.slane %v1244, %v1248
    %v1252 = vsel %vm88, %v1235, 0
    %v1255 = vsel %vm88, %v1236, 0
    %v1258 = vsel %vm88, %v1237, 0
    %v1261 = vsel %vm88, %v1238, 0
    %v1264 = vsel %vm88, %v1239, 0
    %1266 = vmatprep.subr.mxu0 0.0
    %1267 = vmatpush1.msra.mxu0 %v1240
    %1268 = vmatprep.subr.mxu0 0.0
    %1269 = vmatpush1.msra.mxu0 %v1241
    %1270 = vmatprep.subr.mxu0 0.0
    %1271 = vmatpush1.msra.mxu0 %v1242
    %1272 = vmatprep.subr.mxu0 0.0
    %1273 = vmatpush1.msra.mxu0 %v1243
    %1274 = vmatprep.subr.mxu0 0.0
    %1275 = vmatpush1.msra.mxu0 0.0
    %1276 = vmatprep.subr.mxu0 0.0
    %1277 = vmatpush1.msra.mxu0 0.0
    %1278 = vmatprep.subr.mxu0 0.0
    %1279 = vmatpush1.msra.mxu0 0.0
    %1280 = vmatprep.subr.mxu0 0.0
    %1281 = vmatpush1.msra.mxu0 0.0
    %1282 = vmatprep.subr.mxu0 0.0
    %1283 = vmatpush1.msra.mxu0 0.0
    %1284 = vmatprep.subr.mxu0 0.0
    %1285 = vmatpush1.msra.mxu0 0.0
    %1286 = vmatprep.subr.mxu0 0.0
    %1287 = vmatpush1.msra.mxu0 0.0
    %1288 = vmatprep.subr.mxu0 0.0
    %1289 = vmatpush1.msra.mxu0 0.0
    %1290 = vmatprep.subr.mxu0 0.0
    %1291 = vmatpush1.msra.mxu0 0.0
    %1292 = vmatprep.subr.mxu0 0.0
    %1293 = vmatpush1.msra.mxu0 0.0
    %1294 = vmatprep.subr.mxu0 0.0
    %1295 = vmatpush1.msra.mxu0 0.0
    %1296 = vmatprep.subr.mxu0 0.0
    %1297 = vmatpush1.msra.mxu0 0.0
    %1298 = vmatprep.subr.mxu0 0.0
    %1299 = vmatpush1.msra.mxu0 0.0
    %1300 = vmatprep.subr.mxu0 0.0
    %1301 = vmatpush1.msra.mxu0 0.0
    %1302 = vmatprep.subr.mxu0 0.0
    %1303 = vmatpush1.msra.mxu0 0.0
    %1304 = vmatprep.subr.mxu0 0.0
    %1305 = vmatpush1.msra.mxu0 0.0
    %1306 = vmatprep.subr.mxu0 0.0
    %1307 = vmatpush1.msra.mxu0 0.0
    %1308 = vmatprep.subr.mxu0 0.0
    %1309 = vmatpush1.msra.mxu0 0.0
    %1310 = vmatprep.subr.mxu0 0.0
    %1311 = vmatpush1.msra.mxu0 0.0
    %1312 = vmatprep.subr.mxu0 0.0
    %1313 = vmatpush1.msra.mxu0 0.0
    %1314 = vmatprep.subr.mxu0 0.0
    %1315 = vmatpush1.msra.mxu0 0.0
    %1316 = vmatprep.subr.mxu0 0.0
    %1317 = vmatpush1.msra.mxu0 0.0
    %1318 = vmatprep.subr.mxu0 0.0
    %1319 = vmatpush1.msra.mxu0 0.0
    %1320 = vmatprep.subr.mxu0 0.0
    %1321 = vmatpush1.msra.mxu0 0.0
    %1322 = vmatprep.subr.mxu0 0.0
    %1323 = vmatpush1.msra.mxu0 0.0
    %1324 = vmatprep.subr.mxu0 0.0
    %1325 = vmatpush1.msra.mxu0 0.0
    %1326 = vmatprep.subr.mxu0 0.0
    %1327 = vmatpush1.msra.mxu0 0.0
    %1328 = vmatprep.subr.mxu0 0.0
    %1329 = vmatpush1.msra.mxu0 0.0
    %1330 = vmatprep.mubr.f32.mxu0 0.0
    %1331 = vmatmul.mubr.f32.gmra.mrb[0].mxu0 %v1252
    %v1332 = vpop.f32.mrb[0].mxu0
    %v1333 = vadd.f32 %v1249, %v1332
    %v1334 = vpop.f32.mrb[0].mxu0
    %1335 = vmatprep.mubr.f32.mxu0 0.0
    %1336 = vmatmul.mubr.f32.gmra.mrb[0].mxu0 %v1255
    %v1337 = vpop.f32.mrb[0].mxu0
    %v1338 = vadd.f32 %v1249, %v1337
    %v1339 = vpop.f32.mrb[0].mxu0
    %1340 = vmatprep.mubr.f32.mxu0 0.0
    %1341 = vmatmul.mubr.f32.gmra.mrb[0].mxu0 %v1258
    %v1342 = vpop.f32.mrb[0].mxu0
    %v1343 = vadd.f32 %v1249, %v1342
    %v1344 = vpop.f32.mrb[0].mxu0
    %1345 = vmatprep.mubr.f32.mxu0 0.0
    %1346 = vmatmul.mubr.f32.gmra.mrb[0].mxu0 %v1261
    %v1347 = vpop.f32.mrb[0].mxu0
    %v1348 = vadd.f32 %v1249, %v1347
    %v1349 = vpop.f32.mrb[0].mxu0
    %1350 = vmatprep.mubr.f32.mxu0 0.0
    %1351 = vmatmul.mubr.f32.gmra.mrb[0].mxu0 %v1264
    %v1352 = vpop.f32.mrb[0].mxu0
    %v1353 = vadd.f32 %v1249, %v1352
    %v1354 = vpop.f32.mrb[0].mxu0
    %1355 = vdwg.mxu0
    %1356 = vst.msk [vmem:[%s9] sm:$0xff] %vm88, %v1333
    %1357 = vst.msk [vmem:[%s9 + $0x8] sm:$0xff] %vm88, %v1338
    %1358 = vst.msk [vmem:[%s9 + $0x10] sm:$0xff] %vm88, %v1343
    %1359 = vst.msk [vmem:[%s9 + $0x18] sm:$0xff] %vm88, %v1348
    %1360 = vst.msk [vmem:[%s9 + $0x20] sm:$0xf] %vm392, %v1353
    %1361 = vst.msk [vmem:[#allocation9] sm:$0xf] %vm392, %v1232
    %1363 = vrot.lane.b32.xlu0 %v1223, 96
    %v1364 = vpop.permute.xlu0 %1363
    %1366 = vst.msk [vmem:[#allocation10] sm:$0xf] %vm392, %v1364
    // Predicated region
    $region50: #{tpu_custom_call.1} parent=1 // pred_check
      _
    $region51: #{tpu_custom_call.1} parent=1 // pred_check_branch
      %1368 = sbr.rel (0) target = $region53
    $region52: #{tpu_custom_call.1} parent=1 // pred_region
      _
    $region53: #{tpu_custom_call.1} parent=1 // pred_fallthru
      _
    // Predicated region
    $region54: #{tpu_custom_call.1} parent=1 // pred_check
      _
    $region55: #{tpu_custom_call.1} parent=1 // pred_check_branch
      %1370 = sbr.rel (0) target = $region57
    $region56: #{tpu_custom_call.1} parent=1 // pred_region
      %s1372 = ssub.s32 64, 64
      %1373 = vsyncadd [#allocation5], %s1372
      %s1375 = sshll.u32 [#allocation9], 4
      %s1376 = int_to_ptr.vmem [resolvable:$true] %s1375
      %1378 = dma.vmem_to_hbm [thread:$0]  %s1376, 64, %s10, [#allocation5]
    $region57: #{tpu_custom_call.1} parent=1 // pred_fallthru
      _
    // Predicated region
    $region58: #{tpu_custom_call.1} parent=1 // pred_check
      _
    $region59: #{tpu_custom_call.1} parent=1 // pred_check_branch
      %1380 = sbr.rel (0) target = $region61
    $region60: #{tpu_custom_call.1} parent=1 // pred_region
      %s1382 = ssub.s32 64, 64
      %1383 = vsyncadd [#allocation11], %s1382
      %s1385 = sshll.u32 [#allocation10], 4
      %s1386 = int_to_ptr.vmem [resolvable:$true] %s1385
      %1388 = dma.vmem_to_hbm [thread:$0]  %s1386, 64, %s11, [#allocation11]
    $region61: #{tpu_custom_call.1} parent=1 // pred_fallthru
      _
    // Predicated region
    $region62: #{tpu_custom_call.1} parent=1 // pred_check
      _
    $region63: #{tpu_custom_call.1} parent=1 // pred_check_branch
      %1390 = sbr.rel (0) target = $region65
    $region64: #{tpu_custom_call.1} parent=1 // pred_region
      _
    $region65: #{tpu_custom_call.1} parent=1 // pred_fallthru
      _
    // Predicated region
    $region66: #{tpu_custom_call.1} parent=1 // pred_check
      _
    $region67: #{tpu_custom_call.1} parent=1 // pred_check_branch
      %1392 = sbr.rel (0) target = $region69
    $region68: #{tpu_custom_call.1} parent=1 // pred_region
      %1393 = dma.done [#allocation5], 64
    $region69: #{tpu_custom_call.1} parent=1 // pred_fallthru
      _
    // Predicated region
    $region70: #{tpu_custom_call.1} parent=1 // pred_check
      _
    $region71: #{tpu_custom_call.1} parent=1 // pred_check_branch
      %1395 = sbr.rel (0) target = $region73
    $region72: #{tpu_custom_call.1} parent=1 // pred_region
      %1396 = dma.done [#allocation11], 64
    $region73: #{tpu_custom_call.1} parent=1 // pred_fallthru
      _
    %1397 = vsyncpa [#allocation4], 1
    %1398 = vsyncpa [#allocation7], 1
    %1399 = vsyncpa [#allocation5], 1
    %1400 = vsyncpa [#allocation11], 1

</llo_original>
